<compile_context>
chip_gen: v5e
topology: v5e:2x2
jax: 0.10.0
libtpu: 0.0.40
codegen_flags: <defaults>
</compile_context>

<pallas_src>
import functools
import math

import jax
import jax.numpy as jnp
from jax import lax
from jax.experimental import pallas as pl
from jax.experimental.pallas import tpu as pltpu

KSIZE = 7
PAD = (KSIZE - 1) // 2          # 3
_LANES = 128


def _round_up(x, m):
    return (x + m - 1) // m * m


def spatial_attention_kernel(w_ref, x_ref, o_ref, pf_ref, *, W):
    # w_ref : SMEM (2*K*K,) f32   flattened OIHW Conv2d(2,1,K,K) weight
    # x_ref : VMEM (1, C, H*W)    lane-dense input block (one batch element)
    # o_ref : VMEM (1, C, H*W)    lane-dense output block
    # pf_ref: VMEM (2, 1, NPAD)   vertically zero-padded flat conv planes
    C = x_ref.shape[1]
    HW = x_ref.shape[2]
    NPAD = pf_ref.shape[2]
    PW = PAD * W                                  # leading zero rows, flattened

    CB = math.gcd(C, 8)                           # channel chunk (sublane-friendly)
    nchunks = C // CB

    # ---- phase 1: fused channel sum + max, one pass over x ------------------
    def red_body(i, carry):
        s, m = carry
        start = pl.multiple_of(i * CB, CB)
        xb = x_ref[0, pl.ds(start, CB), :].astype(jnp.float32)   # (CB, HW)
        s = s + jnp.sum(xb, axis=0, keepdims=True)
        m = jnp.maximum(m, jnp.max(xb, axis=0, keepdims=True))
        return s, m

    s0 = jnp.zeros((1, HW), jnp.float32)
    m0 = jnp.full((1, HW), -jnp.inf, jnp.float32)
    csum, cmax = lax.fori_loop(0, nchunks, red_body, (s0, m0))
    avg_flat = csum * jnp.float32(1.0 / C)        # multiply by 1/C, no divide

    # ---- phase 2: place planes into the zeroed, vertically padded scratch ---
    pf_ref[...] = jnp.zeros(pf_ref.shape, jnp.float32)
    pf_ref[0, :, pl.ds(PW, HW)] = avg_flat        # channel 0 = mean
    pf_ref[1, :, pl.ds(PW, HW)] = cmax            # channel 1 = max
    planes = (pf_ref[0], pf_ref[1])               # each (1, NPAD)

    # column index of every flattened position (horizontal-border masks)
    col = lax.broadcasted_iota(jnp.int32, (1, NPAD), 1) % W

    # ---- phase 3: 7x7 depth-2 conv via lane rolls + scalar FMAs -------------
    acc = jnp.zeros((1, NPAD), jnp.float32)
    for kw in range(KSIZE):
        tmp = jnp.zeros((1, NPAD), jnp.float32)
        for c in range(2):
            p = planes[c]
            for kh in range(KSIZE):
                src = kh * W + (kw - PAD)         # desired read offset (may be <0)
                shift = (-src) % NPAD             # rolled[o] = p[(o + src) mod NPAD]
                rolled = p if shift == 0 else pltpu.roll(p, shift, axis=1)
                tmp = tmp + rolled * w_ref[c * KSIZE * KSIZE + kh * KSIZE + kw]
        dcol = kw - PAD
        valid = jnp.logical_and(col + dcol >= 0, col + dcol < W)
        acc = acc + jnp.where(valid, tmp, 0.0)

    att = jax.nn.sigmoid(acc)[:, :HW]             # (1, HW) attention map

    # ---- phase 4: rescale x, exactly one lane-dense store per element -------
    att_b = jnp.broadcast_to(att, (CB, HW))       # hoisted broadcast

    def scale_body(i, _):
        start = pl.multiple_of(i * CB, CB)
        xb = x_ref[0, pl.ds(start, CB), :].astype(jnp.float32)
        o_ref[0, pl.ds(start, CB), :] = (xb * att_b).astype(o_ref.dtype)
        return 0

    lax.fori_loop(0, nchunks, scale_body, 0)


def spatial_attention(x, w):
    """x: (N, C, H, W); w: (1, 2, K, K) PyTorch OIHW conv weight (no bias)."""
    N, C, H, W = x.shape
    HW = H * W
    NPAD = _round_up((H + 2 * PAD) * W + 2 * PAD, _LANES)
    x_flat = x.reshape(N, C, HW)                  # lane-dense last dim
    w_flat = w.reshape(-1).astype(jnp.float32)

    kernel = functools.partial(spatial_attention_kernel, W=W)
    out_flat = pl.pallas_call(
        kernel,
        out_shape=jax.ShapeDtypeStruct((N, C, HW), x.dtype),
        grid=(N,),
        in_specs=[
            pl.BlockSpec(memory_space=pltpu.SMEM),               # conv weights
            pl.BlockSpec((1, C, HW), lambda n: (n, 0, 0)),       # x block
        ],
        out_specs=pl.BlockSpec((1, C, HW), lambda n: (n, 0, 0)),
        scratch_shapes=[pltpu.VMEM((2, 1, NPAD), jnp.float32)],
        compiler_params=pltpu.CompilerParams(
            dimension_semantics=("parallel",),
            vmem_limit_bytes=48 * 1024 * 1024),
    )(w_flat, x_flat)
    return out_flat.reshape(N, C, H, W)


def spatial_attention_reference(x, w):
    # Pure-JAX reference mirroring the PyTorch forward.
    avg = jnp.mean(x, axis=1, keepdims=True)
    mx = jnp.max(x, axis=1, keepdims=True)
    cat = jnp.concatenate([avg, mx], axis=1)
    conv = jax.lax.conv_general_dilated(
        cat, w, window_strides=(1, 1),
        padding=((PAD, PAD), (PAD, PAD)),
        dimension_numbers=("NCHW", "OIHW", "NCHW"))
    return x * jax.nn.sigmoid(conv)


if __name__ == "__main__":
    key = jax.random.PRNGKey(0)
    kx, kw_key = jax.random.split(key)

    N, C, H, W = 2, 4, 16, 16
    x = jax.random.normal(kx, (N, C, H, W), dtype=jnp.float32)

    # Deterministic Conv2d(2, 1, 7, bias=False) weight, kaiming-uniform-like.
    fan_in = 2 * KSIZE * KSIZE
    bound = 1.0 / jnp.sqrt(jnp.float32(fan_in))
    w = jax.random.uniform(kw_key, (1, 2, KSIZE, KSIZE),
                           minval=-bound, maxval=bound, dtype=jnp.float32)

    out = spatial_attention(x, w)
    out = jax.block_until_ready(out)

    ref = spatial_attention_reference(x, w)
    assert out.shape == (N, C, H, W)
    assert jnp.allclose(out, ref, atol=1e-5, rtol=1e-5), "mismatch vs reference"

    print("KERNEL_OK")
</pallas_src>

<mosaic_0001>
module attributes {stable_mosaic.version = 11 : i64} {
  func.func @spatial_attention_kernel(%arg0: i32, %arg1: memref<98xf32, #tpu.memory_space<smem>>, %arg2: memref<1x4x256xf32, #tpu.memory_space<vmem>>, %arg3: memref<1x4x256xf32, #tpu.memory_space<vmem>>, %arg4: memref<2x1x384xf32, #tpu.memory_space<vmem>>) attributes {dimension_semantics = [#tpu.dimension_semantics<parallel>], iteration_bounds = array<i64: 2>, scalar_prefetch = 0 : i64, scratch_operands = 1 : i64, tpu.core_type = #tpu.core_type<tc>, window_params = [{transform_indices = @transform_0, window_bounds = array<i64: 98>}, {transform_indices = @transform_1, window_bounds = array<i64: 1, 4, 256>}, {transform_indices = @transform_2, window_bounds = array<i64: 1, 4, 256>}]} {
    %cst = arith.constant 0.000000e+00 : f32
    %0 = vector.broadcast %cst : f32 to vector<1x256xf32>
    %cst_0 = arith.constant 0xFF800000 : f32
    %1 = vector.broadcast %cst_0 : f32 to vector<1x256xf32>
    %c0_i32 = arith.constant 0 : i32
    %c4_i32 = arith.constant 4 : i32
    %2 = arith.muli %c0_i32, %c4_i32 : i32
    %3 = tpu.assume_multiple %2, 4 : i32
    %c0 = arith.constant 0 : index
    %4 = arith.index_cast %3 : i32 to index
    %c0_1 = arith.constant 0 : index
    %5 = vector.load %arg2[%c0, %4, %c0_1] : memref<1x4x256xf32, #tpu.memory_space<vmem>>, vector<1x4x256xf32>
    %6 = vector.shape_cast %5 : vector<1x4x256xf32> to vector<4x256xf32>
    %cst_2 = arith.constant dense<0.000000e+00> : vector<256xf32>
    %7 = vector.multi_reduction <add>, %6, %cst_2 [0] : vector<4x256xf32> to vector<256xf32>
    %8 = vector.shape_cast %7 : vector<256xf32> to vector<1x256xf32>
    %9 = arith.addf %0, %8 : vector<1x256xf32>
    %cst_3 = arith.constant dense<0xFF800000> : vector<256xf32>
    %10 = vector.multi_reduction <maximumf>, %6, %cst_3 [0] : vector<4x256xf32> to vector<256xf32>
    %11 = vector.shape_cast %10 : vector<256xf32> to vector<1x256xf32>
    %12 = arith.maximumf %1, %11 : vector<1x256xf32>
    %c1_i32 = arith.constant 1 : i32
    %cst_4 = arith.constant 2.500000e-01 : f32
    %13 = vector.broadcast %cst_4 : f32 to vector<1x256xf32>
    %14 = arith.mulf %9, %13 : vector<1x256xf32>
    %cst_5 = arith.constant 0.000000e+00 : f32
    %15 = vector.broadcast %cst_5 : f32 to vector<2x1x384xf32>
    %c0_6 = arith.constant 0 : index
    %c0_7 = arith.constant 0 : index
    %c0_8 = arith.constant 0 : index
    %16 = vector.load %arg4[%c0_6, %c0_7, %c0_8] : memref<2x1x384xf32, #tpu.memory_space<vmem>>, vector<2x1x384xf32>
    tpu.vector_store %arg4[%c0_6, %c0_7, %c0_8], %15 {strides = array<i32>} : memref<2x1x384xf32, #tpu.memory_space<vmem>>, vector<2x1x384xf32>,
    %c0_9 = arith.constant 0 : index
    %c0_10 = arith.constant 0 : index
    %c48 = arith.constant 48 : index
    %17 = vector.load %arg4[%c0_9, %c0_10, %c48] : memref<2x1x384xf32, #tpu.memory_space<vmem>>, vector<1x1x256xf32>
    %18 = vector.shape_cast %17 : vector<1x1x256xf32> to vector<1x256xf32>
    %19 = vector.shape_cast %14 : vector<1x256xf32> to vector<1x1x256xf32>
    tpu.vector_store %arg4[%c0_9, %c0_10, %c48], %19 {strides = array<i32>} : memref<2x1x384xf32, #tpu.memory_space<vmem>>, vector<1x1x256xf32>,
    %c1 = arith.constant 1 : index
    %c0_11 = arith.constant 0 : index
    %c48_12 = arith.constant 48 : index
    %20 = vector.load %arg4[%c1, %c0_11, %c48_12] : memref<2x1x384xf32, #tpu.memory_space<vmem>>, vector<1x1x256xf32>
    %21 = vector.shape_cast %20 : vector<1x1x256xf32> to vector<1x256xf32>
    %22 = vector.shape_cast %12 : vector<1x256xf32> to vector<1x1x256xf32>
    tpu.vector_store %arg4[%c1, %c0_11, %c48_12], %22 {strides = array<i32>} : memref<2x1x384xf32, #tpu.memory_space<vmem>>, vector<1x1x256xf32>,
    %c0_13 = arith.constant 0 : index
    %c0_14 = arith.constant 0 : index
    %c0_15 = arith.constant 0 : index
    %23 = vector.load %arg4[%c0_13, %c0_14, %c0_15] : memref<2x1x384xf32, #tpu.memory_space<vmem>>, vector<1x1x384xf32>
    %24 = vector.shape_cast %23 : vector<1x1x384xf32> to vector<1x384xf32>
    %c1_16 = arith.constant 1 : index
    %c0_17 = arith.constant 0 : index
    %c0_18 = arith.constant 0 : index
    %25 = vector.load %arg4[%c1_16, %c0_17, %c0_18] : memref<2x1x384xf32, #tpu.memory_space<vmem>>, vector<1x1x384xf32>
    %26 = vector.shape_cast %25 : vector<1x1x384xf32> to vector<1x384xf32>
    %27 = tpu.iota {dimensions = array<i32: 1>} : vector<1x384xi32>
    %c16_i32 = arith.constant 16 : i32
    %c0_i32_19 = arith.constant 0 : i32
    %28 = arith.cmpi eq, %c16_i32, %c0_i32_19 : i32
    %c1_i32_20 = arith.constant 1 : i32
    %29 = arith.select %28, %c1_i32_20, %c16_i32 : i32
    %30 = vector.broadcast %29 : i32 to vector<1x384xi32>
    %31 = arith.remsi %27, %30 : vector<1x384xi32>
    %c0_i32_21 = arith.constant 0 : i32
    %32 = vector.broadcast %c0_i32_21 : i32 to vector<1x384xi32>
    %33 = arith.cmpi ne, %31, %32 : vector<1x384xi32>
    %c0_i32_22 = arith.constant 0 : i32
    %34 = vector.broadcast %c0_i32_22 : i32 to vector<1x384xi32>
    %35 = arith.cmpi slt, %31, %34 : vector<1x384xi32>
    %c0_i32_23 = arith.constant 0 : i32
    %36 = arith.cmpi slt, %29, %c0_i32_23 : i32
    %37 = vector.broadcast %36 : i1 to vector<1x384xi1>
    %38 = vector.broadcast %37 : vector<1x384xi1> to vector<1x384xi1>
    %39 = arith.xori %35, %38 : vector<1x384xi1>
    %40 = arith.andi %39, %33 : vector<1x384xi1>
    %41 = vector.broadcast %29 : i32 to vector<1x384xi32>
    %42 = arith.addi %31, %41 : vector<1x384xi32>
    %43 = arith.select %40, %42, %31 : vector<1x384xi1>, vector<1x384xi32>
    %cst_24 = arith.constant 0.000000e+00 : f32
    %44 = vector.broadcast %cst_24 : f32 to vector<1x384xf32>
    %cst_25 = arith.constant 0.000000e+00 : f32
    %45 = vector.broadcast %cst_25 : f32 to vector<1x384xf32>
    %c3_i32 = arith.constant 3 : i32
    %46 = tpu.dynamic_rotate %24 by %c3_i32 dim 1 : vector<1x384xf32>, i32 -> vector<1x384xf32>
    %c0_26 = arith.constant 0 : index
    %47 = memref.load %arg1[%c0_26] : memref<98xf32, #tpu.memory_space<smem>>
    %48 = vector.broadcast %47 : f32 to vector<1x384xf32>
    %49 = arith.mulf %46, %48 : vector<1x384xf32>
    %50 = arith.addf %45, %49 : vector<1x384xf32>
    %c371_i32 = arith.constant 371 : i32
    %51 = tpu.dynamic_rotate %24 by %c371_i32 dim 1 : vector<1x384xf32>, i32 -> vector<1x384xf32>
    %c7 = arith.constant 7 : index
    %52 = memref.load %arg1[%c7] : memref<98xf32, #tpu.memory_space<smem>>
    %53 = vector.broadcast %52 : f32 to vector<1x384xf32>
    %54 = arith.mulf %51, %53 : vector<1x384xf32>
    %55 = arith.addf %50, %54 : vector<1x384xf32>
    %c355_i32 = arith.constant 355 : i32
    %56 = tpu.dynamic_rotate %24 by %c355_i32 dim 1 : vector<1x384xf32>, i32 -> vector<1x384xf32>
    %c14 = arith.constant 14 : index
    %57 = memref.load %arg1[%c14] : memref<98xf32, #tpu.memory_space<smem>>
    %58 = vector.broadcast %57 : f32 to vector<1x384xf32>
    %59 = arith.mulf %56, %58 : vector<1x384xf32>
    %60 = arith.addf %55, %59 : vector<1x384xf32>
    %c339_i32 = arith.constant 339 : i32
    %61 = tpu.dynamic_rotate %24 by %c339_i32 dim 1 : vector<1x384xf32>, i32 -> vector<1x384xf32>
    %c21 = arith.constant 21 : index
    %62 = memref.load %arg1[%c21] : memref<98xf32, #tpu.memory_space<smem>>
    %63 = vector.broadcast %62 : f32 to vector<1x384xf32>
    %64 = arith.mulf %61, %63 : vector<1x384xf32>
    %65 = arith.addf %60, %64 : vector<1x384xf32>
    %c323_i32 = arith.constant 323 : i32
    %66 = tpu.dynamic_rotate %24 by %c323_i32 dim 1 : vector<1x384xf32>, i32 -> vector<1x384xf32>
    %c28 = arith.constant 28 : index
    %67 = memref.load %arg1[%c28] : memref<98xf32, #tpu.memory_space<smem>>
    %68 = vector.broadcast %67 : f32 to vector<1x384xf32>
    %69 = arith.mulf %66, %68 : vector<1x384xf32>
    %70 = arith.addf %65, %69 : vector<1x384xf32>
    %c307_i32 = arith.constant 307 : i32
    %71 = tpu.dynamic_rotate %24 by %c307_i32 dim 1 : vector<1x384xf32>, i32 -> vector<1x384xf32>
    %c35 = arith.constant 35 : index
    %72 = memref.load %arg1[%c35] : memref<98xf32, #tpu.memory_space<smem>>
    %73 = vector.broadcast %72 : f32 to vector<1x384xf32>
    %74 = arith.mulf %71, %73 : vector<1x384xf32>
    %75 = arith.addf %70, %74 : vector<1x384xf32>
    %c291_i32 = arith.constant 291 : i32
    %76 = tpu.dynamic_rotate %24 by %c291_i32 dim 1 : vector<1x384xf32>, i32 -> vector<1x384xf32>
    %c42 = arith.constant 42 : index
    %77 = memref.load %arg1[%c42] : memref<98xf32, #tpu.memory_space<smem>>
    %78 = vector.broadcast %77 : f32 to vector<1x384xf32>
    %79 = arith.mulf %76, %78 : vector<1x384xf32>
    %80 = arith.addf %75, %79 : vector<1x384xf32>
    %c3_i32_27 = arith.constant 3 : i32
    %81 = tpu.dynamic_rotate %26 by %c3_i32_27 dim 1 : vector<1x384xf32>, i32 -> vector<1x384xf32>
    %c49 = arith.constant 49 : index
    %82 = memref.load %arg1[%c49] : memref<98xf32, #tpu.memory_space<smem>>
    %83 = vector.broadcast %82 : f32 to vector<1x384xf32>
    %84 = arith.mulf %81, %83 : vector<1x384xf32>
    %85 = arith.addf %80, %84 : vector<1x384xf32>
    %c371_i32_28 = arith.constant 371 : i32
    %86 = tpu.dynamic_rotate %26 by %c371_i32_28 dim 1 : vector<1x384xf32>, i32 -> vector<1x384xf32>
    %c56 = arith.constant 56 : index
    %87 = memref.load %arg1[%c56] : memref<98xf32, #tpu.memory_space<smem>>
    %88 = vector.broadcast %87 : f32 to vector<1x384xf32>
    %89 = arith.mulf %86, %88 : vector<1x384xf32>
    %90 = arith.addf %85, %89 : vector<1x384xf32>
    %c355_i32_29 = arith.constant 355 : i32
    %91 = tpu.dynamic_rotate %26 by %c355_i32_29 dim 1 : vector<1x384xf32>, i32 -> vector<1x384xf32>
    %c63 = arith.constant 63 : index
    %92 = memref.load %arg1[%c63] : memref<98xf32, #tpu.memory_space<smem>>
    %93 = vector.broadcast %92 : f32 to vector<1x384xf32>
    %94 = arith.mulf %91, %93 : vector<1x384xf32>
    %95 = arith.addf %90, %94 : vector<1x384xf32>
    %c339_i32_30 = arith.constant 339 : i32
    %96 = tpu.dynamic_rotate %26 by %c339_i32_30 dim 1 : vector<1x384xf32>, i32 -> vector<1x384xf32>
    %c70 = arith.constant 70 : index
    %97 = memref.load %arg1[%c70] : memref<98xf32, #tpu.memory_space<smem>>
    %98 = vector.broadcast %97 : f32 to vector<1x384xf32>
    %99 = arith.mulf %96, %98 : vector<1x384xf32>
    %100 = arith.addf %95, %99 : vector<1x384xf32>
    %c323_i32_31 = arith.constant 323 : i32
    %101 = tpu.dynamic_rotate %26 by %c323_i32_31 dim 1 : vector<1x384xf32>, i32 -> vector<1x384xf32>
    %c77 = arith.constant 77 : index
    %102 = memref.load %arg1[%c77] : memref<98xf32, #tpu.memory_space<smem>>
    %103 = vector.broadcast %102 : f32 to vector<1x384xf32>
    %104 = arith.mulf %101, %103 : vector<1x384xf32>
    %105 = arith.addf %100, %104 : vector<1x384xf32>
    %c307_i32_32 = arith.constant 307 : i32
    %106 = tpu.dynamic_rotate %26 by %c307_i32_32 dim 1 : vector<1x384xf32>, i32 -> vector<1x384xf32>
    %c84 = arith.constant 84 : index
    %107 = memref.load %arg1[%c84] : memref<98xf32, #tpu.memory_space<smem>>
    %108 = vector.broadcast %107 : f32 to vector<1x384xf32>
    %109 = arith.mulf %106, %108 : vector<1x384xf32>
    %110 = arith.addf %105, %109 : vector<1x384xf32>
    %c291_i32_33 = arith.constant 291 : i32
    %111 = tpu.dynamic_rotate %26 by %c291_i32_33 dim 1 : vector<1x384xf32>, i32 -> vector<1x384xf32>
    %c91 = arith.constant 91 : index
    %112 = memref.load %arg1[%c91] : memref<98xf32, #tpu.memory_space<smem>>
    %113 = vector.broadcast %112 : f32 to vector<1x384xf32>
    %114 = arith.mulf %111, %113 : vector<1x384xf32>
    %115 = arith.addf %110, %114 : vector<1x384xf32>
    %c-3_i32 = arith.constant -3 : i32
    %116 = vector.broadcast %c-3_i32 : i32 to vector<1x384xi32>
    %117 = arith.addi %43, %116 : vector<1x384xi32>
    %c0_i32_34 = arith.constant 0 : i32
    %118 = vector.broadcast %c0_i32_34 : i32 to vector<1x384xi32>
    %119 = arith.cmpi sge, %117, %118 : vector<1x384xi32>
    %c-3_i32_35 = arith.constant -3 : i32
    %120 = vector.broadcast %c-3_i32_35 : i32 to vector<1x384xi32>
    %121 = arith.addi %43, %120 : vector<1x384xi32>
    %c16_i32_36 = arith.constant 16 : i32
    %122 = vector.broadcast %c16_i32_36 : i32 to vector<1x384xi32>
    %123 = arith.cmpi slt, %121, %122 : vector<1x384xi32>
    %124 = arith.andi %119, %123 : vector<1x384xi1>
    %cst_37 = arith.constant 0.000000e+00 : f32
    %125 = vector.broadcast %cst_37 : f32 to vector<1x384xf32>
    %126 = arith.select %124, %115, %125 : vector<1x384xi1>, vector<1x384xf32>
    %127 = arith.addf %44, %126 : vector<1x384xf32>
    %cst_38 = arith.constant 0.000000e+00 : f32
    %128 = vector.broadcast %cst_38 : f32 to vector<1x384xf32>
    %c2_i32 = arith.constant 2 : i32
    %129 = tpu.dynamic_rotate %24 by %c2_i32 dim 1 : vector<1x384xf32>, i32 -> vector<1x384xf32>
    %c1_39 = arith.constant 1 : index
    %130 = memref.load %arg1[%c1_39] : memref<98xf32, #tpu.memory_space<smem>>
    %131 = vector.broadcast %130 : f32 to vector<1x384xf32>
    %132 = arith.mulf %129, %131 : vector<1x384xf32>
    %133 = arith.addf %128, %132 : vector<1x384xf32>
    %c370_i32 = arith.constant 370 : i32
    %134 = tpu.dynamic_rotate %24 by %c370_i32 dim 1 : vector<1x384xf32>, i32 -> vector<1x384xf32>
    %c8 = arith.constant 8 : index
    %135 = memref.load %arg1[%c8] : memref<98xf32, #tpu.memory_space<smem>>
    %136 = vector.broadcast %135 : f32 to vector<1x384xf32>
    %137 = arith.mulf %134, %136 : vector<1x384xf32>
    %138 = arith.addf %133, %137 : vector<1x384xf32>
    %c354_i32 = arith.constant 354 : i32
    %139 = tpu.dynamic_rotate %24 by %c354_i32 dim 1 : vector<1x384xf32>, i32 -> vector<1x384xf32>
    %c15 = arith.constant 15 : index
    %140 = memref.load %arg1[%c15] : memref<98xf32, #tpu.memory_space<smem>>
    %141 = vector.broadcast %140 : f32 to vector<1x384xf32>
    %142 = arith.mulf %139, %141 : vector<1x384xf32>
    %143 = arith.addf %138, %142 : vector<1x384xf32>
    %c338_i32 = arith.constant 338 : i32
    %144 = tpu.dynamic_rotate %24 by %c338_i32 dim 1 : vector<1x384xf32>, i32 -> vector<1x384xf32>
    %c22 = arith.constant 22 : index
    %145 = memref.load %arg1[%c22] : memref<98xf32, #tpu.memory_space<smem>>
    %146 = vector.broadcast %145 : f32 to vector<1x384xf32>
    %147 = arith.mulf %144, %146 : vector<1x384xf32>
    %148 = arith.addf %143, %147 : vector<1x384xf32>
    %c322_i32 = arith.constant 322 : i32
    %149 = tpu.dynamic_rotate %24 by %c322_i32 dim 1 : vector<1x384xf32>, i32 -> vector<1x384xf32>
    %c29 = arith.constant 29 : index
    %150 = memref.load %arg1[%c29] : memref<98xf32, #tpu.memory_space<smem>>
    %151 = vector.broadcast %150 : f32 to vector<1x384xf32>
    %152 = arith.mulf %149, %151 : vector<1x384xf32>
    %153 = arith.addf %148, %152 : vector<1x384xf32>
    %c306_i32 = arith.constant 306 : i32
    %154 = tpu.dynamic_rotate %24 by %c306_i32 dim 1 : vector<1x384xf32>, i32 -> vector<1x384xf32>
    %c36 = arith.constant 36 : index
    %155 = memref.load %arg1[%c36] : memref<98xf32, #tpu.memory_space<smem>>
    %156 = vector.broadcast %155 : f32 to vector<1x384xf32>
    %157 = arith.mulf %154, %156 : vector<1x384xf32>
    %158 = arith.addf %153, %157 : vector<1x384xf32>
    %c290_i32 = arith.constant 290 : i32
    %159 = tpu.dynamic_rotate %24 by %c290_i32 dim 1 : vector<1x384xf32>, i32 -> vector<1x384xf32>
    %c43 = arith.constant 43 : index
    %160 = memref.load %arg1[%c43] : memref<98xf32, #tpu.memory_space<smem>>
    %161 = vector.broadcast %160 : f32 to vector<1x384xf32>
    %162 = arith.mulf %159, %161 : vector<1x384xf32>
    %163 = arith.addf %158, %162 : vector<1x384xf32>
    %c2_i32_40 = arith.constant 2 : i32
    %164 = tpu.dynamic_rotate %26 by %c2_i32_40 dim 1 : vector<1x384xf32>, i32 -> vector<1x384xf32>
    %c50 = arith.constant 50 : index
    %165 = memref.load %arg1[%c50] : memref<98xf32, #tpu.memory_space<smem>>
    %166 = vector.broadcast %165 : f32 to vector<1x384xf32>
    %167 = arith.mulf %164, %166 : vector<1x384xf32>
    %168 = arith.addf %163, %167 : vector<1x384xf32>
    %c370_i32_41 = arith.constant 370 : i32
    %169 = tpu.dynamic_rotate %26 by %c370_i32_41 dim 1 : vector<1x384xf32>, i32 -> vector<1x384xf32>
    %c57 = arith.constant 57 : index
    %170 = memref.load %arg1[%c57] : memref<98xf32, #tpu.memory_space<smem>>
    %171 = vector.broadcast %170 : f32 to vector<1x384xf32>
    %172 = arith.mulf %169, %171 : vector<1x384xf32>
    %173 = arith.addf %168, %172 : vector<1x384xf32>
    %c354_i32_42 = arith.constant 354 : i32
    %174 = tpu.dynamic_rotate %26 by %c354_i32_42 dim 1 : vector<1x384xf32>, i32 -> vector<1x384xf32>
    %c64 = arith.constant 64 : index
    %175 = memref.load %arg1[%c64] : memref<98xf32, #tpu.memory_space<smem>>
    %176 = vector.broadcast %175 : f32 to vector<1x384xf32>
    %177 = arith.mulf %174, %176 : vector<1x384xf32>
    %178 = arith.addf %173, %177 : vector<1x384xf32>
    %c338_i32_43 = arith.constant 338 : i32
    %179 = tpu.dynamic_rotate %26 by %c338_i32_43 dim 1 : vector<1x384xf32>, i32 -> vector<1x384xf32>
    %c71 = arith.constant 71 : index
    %180 = memref.load %arg1[%c71] : memref<98xf32, #tpu.memory_space<smem>>
    %181 = vector.broadcast %180 : f32 to vector<1x384xf32>
    %182 = arith.mulf %179, %181 : vector<1x384xf32>
    %183 = arith.addf %178, %182 : vector<1x384xf32>
    %c322_i32_44 = arith.constant 322 : i32
    %184 = tpu.dynamic_rotate %26 by %c322_i32_44 dim 1 : vector<1x384xf32>, i32 -> vector<1x384xf32>
    %c78 = arith.constant 78 : index
    %185 = memref.load %arg1[%c78] : memref<98xf32, #tpu.memory_space<smem>>
    %186 = vector.broadcast %185 : f32 to vector<1x384xf32>
    %187 = arith.mulf %184, %186 : vector<1x384xf32>
    %188 = arith.addf %183, %187 : vector<1x384xf32>
    %c306_i32_45 = arith.constant 306 : i32
    %189 = tpu.dynamic_rotate %26 by %c306_i32_45 dim 1 : vector<1x384xf32>, i32 -> vector<1x384xf32>
    %c85 = arith.constant 85 : index
    %190 = memref.load %arg1[%c85] : memref<98xf32, #tpu.memory_space<smem>>
    %191 = vector.broadcast %190 : f32 to vector<1x384xf32>
    %192 = arith.mulf %189, %191 : vector<1x384xf32>
    %193 = arith.addf %188, %192 : vector<1x384xf32>
    %c290_i32_46 = arith.constant 290 : i32
    %194 = tpu.dynamic_rotate %26 by %c290_i32_46 dim 1 : vector<1x384xf32>, i32 -> vector<1x384xf32>
    %c92 = arith.constant 92 : index
    %195 = memref.load %arg1[%c92] : memref<98xf32, #tpu.memory_space<smem>>
    %196 = vector.broadcast %195 : f32 to vector<1x384xf32>
    %197 = arith.mulf %194, %196 : vector<1x384xf32>
    %198 = arith.addf %193, %197 : vector<1x384xf32>
    %c-2_i32 = arith.constant -2 : i32
    %199 = vector.broadcast %c-2_i32 : i32 to vector<1x384xi32>
    %200 = arith.addi %43, %199 : vector<1x384xi32>
    %c0_i32_47 = arith.constant 0 : i32
    %201 = vector.broadcast %c0_i32_47 : i32 to vector<1x384xi32>
    %202 = arith.cmpi sge, %200, %201 : vector<1x384xi32>
    %c-2_i32_48 = arith.constant -2 : i32
    %203 = vector.broadcast %c-2_i32_48 : i32 to vector<1x384xi32>
    %204 = arith.addi %43, %203 : vector<1x384xi32>
    %c16_i32_49 = arith.constant 16 : i32
    %205 = vector.broadcast %c16_i32_49 : i32 to vector<1x384xi32>
    %206 = arith.cmpi slt, %204, %205 : vector<1x384xi32>
    %207 = arith.andi %202, %206 : vector<1x384xi1>
    %cst_50 = arith.constant 0.000000e+00 : f32
    %208 = vector.broadcast %cst_50 : f32 to vector<1x384xf32>
    %209 = arith.select %207, %198, %208 : vector<1x384xi1>, vector<1x384xf32>
    %210 = arith.addf %127, %209 : vector<1x384xf32>
    %cst_51 = arith.constant 0.000000e+00 : f32
    %211 = vector.broadcast %cst_51 : f32 to vector<1x384xf32>
    %c1_i32_52 = arith.constant 1 : i32
    %212 = tpu.dynamic_rotate %24 by %c1_i32_52 dim 1 : vector<1x384xf32>, i32 -> vector<1x384xf32>
    %c2 = arith.constant 2 : index
    %213 = memref.load %arg1[%c2] : memref<98xf32, #tpu.memory_space<smem>>
    %214 = vector.broadcast %213 : f32 to vector<1x384xf32>
    %215 = arith.mulf %212, %214 : vector<1x384xf32>
    %216 = arith.addf %211, %215 : vector<1x384xf32>
    %c369_i32 = arith.constant 369 : i32
    %217 = tpu.dynamic_rotate %24 by %c369_i32 dim 1 : vector<1x384xf32>, i32 -> vector<1x384xf32>
    %c9 = arith.constant 9 : index
    %218 = memref.load %arg1[%c9] : memref<98xf32, #tpu.memory_space<smem>>
    %219 = vector.broadcast %218 : f32 to vector<1x384xf32>
    %220 = arith.mulf %217, %219 : vector<1x384xf32>
    %221 = arith.addf %216, %220 : vector<1x384xf32>
    %c353_i32 = arith.constant 353 : i32
    %222 = tpu.dynamic_rotate %24 by %c353_i32 dim 1 : vector<1x384xf32>, i32 -> vector<1x384xf32>
    %c16 = arith.constant 16 : index
    %223 = memref.load %arg1[%c16] : memref<98xf32, #tpu.memory_space<smem>>
    %224 = vector.broadcast %223 : f32 to vector<1x384xf32>
    %225 = arith.mulf %222, %224 : vector<1x384xf32>
    %226 = arith.addf %221, %225 : vector<1x384xf32>
    %c337_i32 = arith.constant 337 : i32
    %227 = tpu.dynamic_rotate %24 by %c337_i32 dim 1 : vector<1x384xf32>, i32 -> vector<1x384xf32>
    %c23 = arith.constant 23 : index
    %228 = memref.load %arg1[%c23] : memref<98xf32, #tpu.memory_space<smem>>
    %229 = vector.broadcast %228 : f32 to vector<1x384xf32>
    %230 = arith.mulf %227, %229 : vector<1x384xf32>
    %231 = arith.addf %226, %230 : vector<1x384xf32>
    %c321_i32 = arith.constant 321 : i32
    %232 = tpu.dynamic_rotate %24 by %c321_i32 dim 1 : vector<1x384xf32>, i32 -> vector<1x384xf32>
    %c30 = arith.constant 30 : index
    %233 = memref.load %arg1[%c30] : memref<98xf32, #tpu.memory_space<smem>>
    %234 = vector.broadcast %233 : f32 to vector<1x384xf32>
    %235 = arith.mulf %232, %234 : vector<1x384xf32>
    %236 = arith.addf %231, %235 : vector<1x384xf32>
    %c305_i32 = arith.constant 305 : i32
    %237 = tpu.dynamic_rotate %24 by %c305_i32 dim 1 : vector<1x384xf32>, i32 -> vector<1x384xf32>
    %c37 = arith.constant 37 : index
    %238 = memref.load %arg1[%c37] : memref<98xf32, #tpu.memory_space<smem>>
    %239 = vector.broadcast %238 : f32 to vector<1x384xf32>
    %240 = arith.mulf %237, %239 : vector<1x384xf32>
    %241 = arith.addf %236, %240 : vector<1x384xf32>
    %c289_i32 = arith.constant 289 : i32
    %242 = tpu.dynamic_rotate %24 by %c289_i32 dim 1 : vector<1x384xf32>, i32 -> vector<1x384xf32>
    %c44 = arith.constant 44 : index
    %243 = memref.load %arg1[%c44] : memref<98xf32, #tpu.memory_space<smem>>
    %244 = vector.broadcast %243 : f32 to vector<1x384xf32>
    %245 = arith.mulf %242, %244 : vector<1x384xf32>
    %246 = arith.addf %241, %245 : vector<1x384xf32>
    %c1_i32_53 = arith.constant 1 : i32
    %247 = tpu.dynamic_rotate %26 by %c1_i32_53 dim 1 : vector<1x384xf32>, i32 -> vector<1x384xf32>
    %c51 = arith.constant 51 : index
    %248 = memref.load %arg1[%c51] : memref<98xf32, #tpu.memory_space<smem>>
    %249 = vector.broadcast %248 : f32 to vector<1x384xf32>
    %250 = arith.mulf %247, %249 : vector<1x384xf32>
    %251 = arith.addf %246, %250 : vector<1x384xf32>
    %c369_i32_54 = arith.constant 369 : i32
    %252 = tpu.dynamic_rotate %26 by %c369_i32_54 dim 1 : vector<1x384xf32>, i32 -> vector<1x384xf32>
    %c58 = arith.constant 58 : index
    %253 = memref.load %arg1[%c58] : memref<98xf32, #tpu.memory_space<smem>>
    %254 = vector.broadcast %253 : f32 to vector<1x384xf32>
    %255 = arith.mulf %252, %254 : vector<1x384xf32>
    %256 = arith.addf %251, %255 : vector<1x384xf32>
    %c353_i32_55 = arith.constant 353 : i32
    %257 = tpu.dynamic_rotate %26 by %c353_i32_55 dim 1 : vector<1x384xf32>, i32 -> vector<1x384xf32>
    %c65 = arith.constant 65 : index
    %258 = memref.load %arg1[%c65] : memref<98xf32, #tpu.memory_space<smem>>
    %259 = vector.broadcast %258 : f32 to vector<1x384xf32>
    %260 = arith.mulf %257, %259 : vector<1x384xf32>
    %261 = arith.addf %256, %260 : vector<1x384xf32>
    %c337_i32_56 = arith.constant 337 : i32
    %262 = tpu.dynamic_rotate %26 by %c337_i32_56 dim 1 : vector<1x384xf32>, i32 -> vector<1x384xf32>
    %c72 = arith.constant 72 : index
    %263 = memref.load %arg1[%c72] : memref<98xf32, #tpu.memory_space<smem>>
    %264 = vector.broadcast %263 : f32 to vector<1x384xf32>
    %265 = arith.mulf %262, %264 : vector<1x384xf32>
    %266 = arith.addf %261, %265 : vector<1x384xf32>
    %c321_i32_57 = arith.constant 321 : i32
    %267 = tpu.dynamic_rotate %26 by %c321_i32_57 dim 1 : vector<1x384xf32>, i32 -> vector<1x384xf32>
    %c79 = arith.constant 79 : index
    %268 = memref.load %arg1[%c79] : memref<98xf32, #tpu.memory_space<smem>>
    %269 = vector.broadcast %268 : f32 to vector<1x384xf32>
    %270 = arith.mulf %267, %269 : vector<1x384xf32>
    %271 = arith.addf %266, %270 : vector<1x384xf32>
    %c305_i32_58 = arith.constant 305 : i32
    %272 = tpu.dynamic_rotate %26 by %c305_i32_58 dim 1 : vector<1x384xf32>, i32 -> vector<1x384xf32>
    %c86 = arith.constant 86 : index
    %273 = memref.load %arg1[%c86] : memref<98xf32, #tpu.memory_space<smem>>
    %274 = vector.broadcast %273 : f32 to vector<1x384xf32>
    %275 = arith.mulf %272, %274 : vector<1x384xf32>
    %276 = arith.addf %271, %275 : vector<1x384xf32>
    %c289_i32_59 = arith.constant 289 : i32
    %277 = tpu.dynamic_rotate %26 by %c289_i32_59 dim 1 : vector<1x384xf32>, i32 -> vector<1x384xf32>
    %c93 = arith.constant 93 : index
    %278 = memref.load %arg1[%c93] : memref<98xf32, #tpu.memory_space<smem>>
    %279 = vector.broadcast %278 : f32 to vector<1x384xf32>
    %280 = arith.mulf %277, %279 : vector<1x384xf32>
    %281 = arith.addf %276, %280 : vector<1x384xf32>
    %c-1_i32 = arith.constant -1 : i32
    %282 = vector.broadcast %c-1_i32 : i32 to vector<1x384xi32>
    %283 = arith.addi %43, %282 : vector<1x384xi32>
    %c0_i32_60 = arith.constant 0 : i32
    %284 = vector.broadcast %c0_i32_60 : i32 to vector<1x384xi32>
    %285 = arith.cmpi sge, %283, %284 : vector<1x384xi32>
    %c-1_i32_61 = arith.constant -1 : i32
    %286 = vector.broadcast %c-1_i32_61 : i32 to vector<1x384xi32>
    %287 = arith.addi %43, %286 : vector<1x384xi32>
    %c16_i32_62 = arith.constant 16 : i32
    %288 = vector.broadcast %c16_i32_62 : i32 to vector<1x384xi32>
    %289 = arith.cmpi slt, %287, %288 : vector<1x384xi32>
    %290 = arith.andi %285, %289 : vector<1x384xi1>
    %cst_63 = arith.constant 0.000000e+00 : f32
    %291 = vector.broadcast %cst_63 : f32 to vector<1x384xf32>
    %292 = arith.select %290, %281, %291 : vector<1x384xi1>, vector<1x384xf32>
    %293 = arith.addf %210, %292 : vector<1x384xf32>
    %cst_64 = arith.constant 0.000000e+00 : f32
    %294 = vector.broadcast %cst_64 : f32 to vector<1x384xf32>
    %c3 = arith.constant 3 : index
    %295 = memref.load %arg1[%c3] : memref<98xf32, #tpu.memory_space<smem>>
    %296 = vector.broadcast %295 : f32 to vector<1x384xf32>
    %297 = arith.mulf %24, %296 : vector<1x384xf32>
    %298 = arith.addf %294, %297 : vector<1x384xf32>
    %c368_i32 = arith.constant 368 : i32
    %299 = tpu.dynamic_rotate %24 by %c368_i32 dim 1 : vector<1x384xf32>, i32 -> vector<1x384xf32>
    %c10 = arith.constant 10 : index
    %300 = memref.load %arg1[%c10] : memref<98xf32, #tpu.memory_space<smem>>
    %301 = vector.broadcast %300 : f32 to vector<1x384xf32>
    %302 = arith.mulf %299, %301 : vector<1x384xf32>
    %303 = arith.addf %298, %302 : vector<1x384xf32>
    %c352_i32 = arith.constant 352 : i32
    %304 = tpu.dynamic_rotate %24 by %c352_i32 dim 1 : vector<1x384xf32>, i32 -> vector<1x384xf32>
    %c17 = arith.constant 17 : index
    %305 = memref.load %arg1[%c17] : memref<98xf32, #tpu.memory_space<smem>>
    %306 = vector.broadcast %305 : f32 to vector<1x384xf32>
    %307 = arith.mulf %304, %306 : vector<1x384xf32>
    %308 = arith.addf %303, %307 : vector<1x384xf32>
    %c336_i32 = arith.constant 336 : i32
    %309 = tpu.dynamic_rotate %24 by %c336_i32 dim 1 : vector<1x384xf32>, i32 -> vector<1x384xf32>
    %c24 = arith.constant 24 : index
    %310 = memref.load %arg1[%c24] : memref<98xf32, #tpu.memory_space<smem>>
    %311 = vector.broadcast %310 : f32 to vector<1x384xf32>
    %312 = arith.mulf %309, %311 : vector<1x384xf32>
    %313 = arith.addf %308, %312 : vector<1x384xf32>
    %c320_i32 = arith.constant 320 : i32
    %314 = tpu.dynamic_rotate %24 by %c320_i32 dim 1 : vector<1x384xf32>, i32 -> vector<1x384xf32>
    %c31 = arith.constant 31 : index
    %315 = memref.load %arg1[%c31] : memref<98xf32, #tpu.memory_space<smem>>
    %316 = vector.broadcast %315 : f32 to vector<1x384xf32>
    %317 = arith.mulf %314, %316 : vector<1x384xf32>
    %318 = arith.addf %313, %317 : vector<1x384xf32>
    %c304_i32 = arith.constant 304 : i32
    %319 = tpu.dynamic_rotate %24 by %c304_i32 dim 1 : vector<1x384xf32>, i32 -> vector<1x384xf32>
    %c38 = arith.constant 38 : index
    %320 = memref.load %arg1[%c38] : memref<98xf32, #tpu.memory_space<smem>>
    %321 = vector.broadcast %320 : f32 to vector<1x384xf32>
    %322 = arith.mulf %319, %321 : vector<1x384xf32>
    %323 = arith.addf %318, %322 : vector<1x384xf32>
    %c288_i32 = arith.constant 288 : i32
    %324 = tpu.dynamic_rotate %24 by %c288_i32 dim 1 : vector<1x384xf32>, i32 -> vector<1x384xf32>
    %c45 = arith.constant 45 : index
    %325 = memref.load %arg1[%c45] : memref<98xf32, #tpu.memory_space<smem>>
    %326 = vector.broadcast %325 : f32 to vector<1x384xf32>
    %327 = arith.mulf %324, %326 : vector<1x384xf32>
    %328 = arith.addf %323, %327 : vector<1x384xf32>
    %c52 = arith.constant 52 : index
    %329 = memref.load %arg1[%c52] : memref<98xf32, #tpu.memory_space<smem>>
    %330 = vector.broadcast %329 : f32 to vector<1x384xf32>
    %331 = arith.mulf %26, %330 : vector<1x384xf32>
    %332 = arith.addf %328, %331 : vector<1x384xf32>
    %c368_i32_65 = arith.constant 368 : i32
    %333 = tpu.dynamic_rotate %26 by %c368_i32_65 dim 1 : vector<1x384xf32>, i32 -> vector<1x384xf32>
    %c59 = arith.constant 59 : index
    %334 = memref.load %arg1[%c59] : memref<98xf32, #tpu.memory_space<smem>>
    %335 = vector.broadcast %334 : f32 to vector<1x384xf32>
    %336 = arith.mulf %333, %335 : vector<1x384xf32>
    %337 = arith.addf %332, %336 : vector<1x384xf32>
    %c352_i32_66 = arith.constant 352 : i32
    %338 = tpu.dynamic_rotate %26 by %c352_i32_66 dim 1 : vector<1x384xf32>, i32 -> vector<1x384xf32>
    %c66 = arith.constant 66 : index
    %339 = memref.load %arg1[%c66] : memref<98xf32, #tpu.memory_space<smem>>
    %340 = vector.broadcast %339 : f32 to vector<1x384xf32>
    %341 = arith.mulf %338, %340 : vector<1x384xf32>
    %342 = arith.addf %337, %341 : vector<1x384xf32>
    %c336_i32_67 = arith.constant 336 : i32
    %343 = tpu.dynamic_rotate %26 by %c336_i32_67 dim 1 : vector<1x384xf32>, i32 -> vector<1x384xf32>
    %c73 = arith.constant 73 : index
    %344 = memref.load %arg1[%c73] : memref<98xf32, #tpu.memory_space<smem>>
    %345 = vector.broadcast %344 : f32 to vector<1x384xf32>
    %346 = arith.mulf %343, %345 : vector<1x384xf32>
    %347 = arith.addf %342, %346 : vector<1x384xf32>
    %c320_i32_68 = arith.constant 320 : i32
    %348 = tpu.dynamic_rotate %26 by %c320_i32_68 dim 1 : vector<1x384xf32>, i32 -> vector<1x384xf32>
    %c80 = arith.constant 80 : index
    %349 = memref.load %arg1[%c80] : memref<98xf32, #tpu.memory_space<smem>>
    %350 = vector.broadcast %349 : f32 to vector<1x384xf32>
    %351 = arith.mulf %348, %350 : vector<1x384xf32>
    %352 = arith.addf %347, %351 : vector<1x384xf32>
    %c304_i32_69 = arith.constant 304 : i32
    %353 = tpu.dynamic_rotate %26 by %c304_i32_69 dim 1 : vector<1x384xf32>, i32 -> vector<1x384xf32>
    %c87 = arith.constant 87 : index
    %354 = memref.load %arg1[%c87] : memref<98xf32, #tpu.memory_space<smem>>
    %355 = vector.broadcast %354 : f32 to vector<1x384xf32>
    %356 = arith.mulf %353, %355 : vector<1x384xf32>
    %357 = arith.addf %352, %356 : vector<1x384xf32>
    %c288_i32_70 = arith.constant 288 : i32
    %358 = tpu.dynamic_rotate %26 by %c288_i32_70 dim 1 : vector<1x384xf32>, i32 -> vector<1x384xf32>
    %c94 = arith.constant 94 : index
    %359 = memref.load %arg1[%c94] : memref<98xf32, #tpu.memory_space<smem>>
    %360 = vector.broadcast %359 : f32 to vector<1x384xf32>
    %361 = arith.mulf %358, %360 : vector<1x384xf32>
    %362 = arith.addf %357, %361 : vector<1x384xf32>
    %c0_i32_71 = arith.constant 0 : i32
    %363 = vector.broadcast %c0_i32_71 : i32 to vector<1x384xi32>
    %364 = arith.addi %43, %363 : vector<1x384xi32>
    %c0_i32_72 = arith.constant 0 : i32
    %365 = vector.broadcast %c0_i32_72 : i32 to vector<1x384xi32>
    %366 = arith.cmpi sge, %364, %365 : vector<1x384xi32>
    %c0_i32_73 = arith.constant 0 : i32
    %367 = vector.broadcast %c0_i32_73 : i32 to vector<1x384xi32>
    %368 = arith.addi %43, %367 : vector<1x384xi32>
    %c16_i32_74 = arith.constant 16 : i32
    %369 = vector.broadcast %c16_i32_74 : i32 to vector<1x384xi32>
    %370 = arith.cmpi slt, %368, %369 : vector<1x384xi32>
    %371 = arith.andi %366, %370 : vector<1x384xi1>
    %cst_75 = arith.constant 0.000000e+00 : f32
    %372 = vector.broadcast %cst_75 : f32 to vector<1x384xf32>
    %373 = arith.select %371, %362, %372 : vector<1x384xi1>, vector<1x384xf32>
    %374 = arith.addf %293, %373 : vector<1x384xf32>
    %cst_76 = arith.constant 0.000000e+00 : f32
    %375 = vector.broadcast %cst_76 : f32 to vector<1x384xf32>
    %c383_i32 = arith.constant 383 : i32
    %376 = tpu.dynamic_rotate %24 by %c383_i32 dim 1 : vector<1x384xf32>, i32 -> vector<1x384xf32>
    %c4 = arith.constant 4 : index
    %377 = memref.load %arg1[%c4] : memref<98xf32, #tpu.memory_space<smem>>
    %378 = vector.broadcast %377 : f32 to vector<1x384xf32>
    %379 = arith.mulf %376, %378 : vector<1x384xf32>
    %380 = arith.addf %375, %379 : vector<1x384xf32>
    %c367_i32 = arith.constant 367 : i32
    %381 = tpu.dynamic_rotate %24 by %c367_i32 dim 1 : vector<1x384xf32>, i32 -> vector<1x384xf32>
    %c11 = arith.constant 11 : index
    %382 = memref.load %arg1[%c11] : memref<98xf32, #tpu.memory_space<smem>>
    %383 = vector.broadcast %382 : f32 to vector<1x384xf32>
    %384 = arith.mulf %381, %383 : vector<1x384xf32>
    %385 = arith.addf %380, %384 : vector<1x384xf32>
    %c351_i32 = arith.constant 351 : i32
    %386 = tpu.dynamic_rotate %24 by %c351_i32 dim 1 : vector<1x384xf32>, i32 -> vector<1x384xf32>
    %c18 = arith.constant 18 : index
    %387 = memref.load %arg1[%c18] : memref<98xf32, #tpu.memory_space<smem>>
    %388 = vector.broadcast %387 : f32 to vector<1x384xf32>
    %389 = arith.mulf %386, %388 : vector<1x384xf32>
    %390 = arith.addf %385, %389 : vector<1x384xf32>
    %c335_i32 = arith.constant 335 : i32
    %391 = tpu.dynamic_rotate %24 by %c335_i32 dim 1 : vector<1x384xf32>, i32 -> vector<1x384xf32>
    %c25 = arith.constant 25 : index
    %392 = memref.load %arg1[%c25] : memref<98xf32, #tpu.memory_space<smem>>
    %393 = vector.broadcast %392 : f32 to vector<1x384xf32>
    %394 = arith.mulf %391, %393 : vector<1x384xf32>
    %395 = arith.addf %390, %394 : vector<1x384xf32>
    %c319_i32 = arith.constant 319 : i32
    %396 = tpu.dynamic_rotate %24 by %c319_i32 dim 1 : vector<1x384xf32>, i32 -> vector<1x384xf32>
    %c32 = arith.constant 32 : index
    %397 = memref.load %arg1[%c32] : memref<98xf32, #tpu.memory_space<smem>>
    %398 = vector.broadcast %397 : f32 to vector<1x384xf32>
    %399 = arith.mulf %396, %398 : vector<1x384xf32>
    %400 = arith.addf %395, %399 : vector<1x384xf32>
    %c303_i32 = arith.constant 303 : i32
    %401 = tpu.dynamic_rotate %24 by %c303_i32 dim 1 : vector<1x384xf32>, i32 -> vector<1x384xf32>
    %c39 = arith.constant 39 : index
    %402 = memref.load %arg1[%c39] : memref<98xf32, #tpu.memory_space<smem>>
    %403 = vector.broadcast %402 : f32 to vector<1x384xf32>
    %404 = arith.mulf %401, %403 : vector<1x384xf32>
    %405 = arith.addf %400, %404 : vector<1x384xf32>
    %c287_i32 = arith.constant 287 : i32
    %406 = tpu.dynamic_rotate %24 by %c287_i32 dim 1 : vector<1x384xf32>, i32 -> vector<1x384xf32>
    %c46 = arith.constant 46 : index
    %407 = memref.load %arg1[%c46] : memref<98xf32, #tpu.memory_space<smem>>
    %408 = vector.broadcast %407 : f32 to vector<1x384xf32>
    %409 = arith.mulf %406, %408 : vector<1x384xf32>
    %410 = arith.addf %405, %409 : vector<1x384xf32>
    %c383_i32_77 = arith.constant 383 : i32
    %411 = tpu.dynamic_rotate %26 by %c383_i32_77 dim 1 : vector<1x384xf32>, i32 -> vector<1x384xf32>
    %c53 = arith.constant 53 : index
    %412 = memref.load %arg1[%c53] : memref<98xf32, #tpu.memory_space<smem>>
    %413 = vector.broadcast %412 : f32 to vector<1x384xf32>
    %414 = arith.mulf %411, %413 : vector<1x384xf32>
    %415 = arith.addf %410, %414 : vector<1x384xf32>
    %c367_i32_78 = arith.constant 367 : i32
    %416 = tpu.dynamic_rotate %26 by %c367_i32_78 dim 1 : vector<1x384xf32>, i32 -> vector<1x384xf32>
    %c60 = arith.constant 60 : index
    %417 = memref.load %arg1[%c60] : memref<98xf32, #tpu.memory_space<smem>>
    %418 = vector.broadcast %417 : f32 to vector<1x384xf32>
    %419 = arith.mulf %416, %418 : vector<1x384xf32>
    %420 = arith.addf %415, %419 : vector<1x384xf32>
    %c351_i32_79 = arith.constant 351 : i32
    %421 = tpu.dynamic_rotate %26 by %c351_i32_79 dim 1 : vector<1x384xf32>, i32 -> vector<1x384xf32>
    %c67 = arith.constant 67 : index
    %422 = memref.load %arg1[%c67] : memref<98xf32, #tpu.memory_space<smem>>
    %423 = vector.broadcast %422 : f32 to vector<1x384xf32>
    %424 = arith.mulf %421, %423 : vector<1x384xf32>
    %425 = arith.addf %420, %424 : vector<1x384xf32>
    %c335_i32_80 = arith.constant 335 : i32
    %426 = tpu.dynamic_rotate %26 by %c335_i32_80 dim 1 : vector<1x384xf32>, i32 -> vector<1x384xf32>
    %c74 = arith.constant 74 : index
    %427 = memref.load %arg1[%c74] : memref<98xf32, #tpu.memory_space<smem>>
    %428 = vector.broadcast %427 : f32 to vector<1x384xf32>
    %429 = arith.mulf %426, %428 : vector<1x384xf32>
    %430 = arith.addf %425, %429 : vector<1x384xf32>
    %c319_i32_81 = arith.constant 319 : i32
    %431 = tpu.dynamic_rotate %26 by %c319_i32_81 dim 1 : vector<1x384xf32>, i32 -> vector<1x384xf32>
    %c81 = arith.constant 81 : index
    %432 = memref.load %arg1[%c81] : memref<98xf32, #tpu.memory_space<smem>>
    %433 = vector.broadcast %432 : f32 to vector<1x384xf32>
    %434 = arith.mulf %431, %433 : vector<1x384xf32>
    %435 = arith.addf %430, %434 : vector<1x384xf32>
    %c303_i32_82 = arith.constant 303 : i32
    %436 = tpu.dynamic_rotate %26 by %c303_i32_82 dim 1 : vector<1x384xf32>, i32 -> vector<1x384xf32>
    %c88 = arith.constant 88 : index
    %437 = memref.load %arg1[%c88] : memref<98xf32, #tpu.memory_space<smem>>
    %438 = vector.broadcast %437 : f32 to vector<1x384xf32>
    %439 = arith.mulf %436, %438 : vector<1x384xf32>
    %440 = arith.addf %435, %439 : vector<1x384xf32>
    %c287_i32_83 = arith.constant 287 : i32
    %441 = tpu.dynamic_rotate %26 by %c287_i32_83 dim 1 : vector<1x384xf32>, i32 -> vector<1x384xf32>
    %c95 = arith.constant 95 : index
    %442 = memref.load %arg1[%c95] : memref<98xf32, #tpu.memory_space<smem>>
    %443 = vector.broadcast %442 : f32 to vector<1x384xf32>
    %444 = arith.mulf %441, %443 : vector<1x384xf32>
    %445 = arith.addf %440, %444 : vector<1x384xf32>
    %c1_i32_84 = arith.constant 1 : i32
    %446 = vector.broadcast %c1_i32_84 : i32 to vector<1x384xi32>
    %447 = arith.addi %43, %446 : vector<1x384xi32>
    %c0_i32_85 = arith.constant 0 : i32
    %448 = vector.broadcast %c0_i32_85 : i32 to vector<1x384xi32>
    %449 = arith.cmpi sge, %447, %448 : vector<1x384xi32>
    %c1_i32_86 = arith.constant 1 : i32
    %450 = vector.broadcast %c1_i32_86 : i32 to vector<1x384xi32>
    %451 = arith.addi %43, %450 : vector<1x384xi32>
    %c16_i32_87 = arith.constant 16 : i32
    %452 = vector.broadcast %c16_i32_87 : i32 to vector<1x384xi32>
    %453 = arith.cmpi slt, %451, %452 : vector<1x384xi32>
    %454 = arith.andi %449, %453 : vector<1x384xi1>
    %cst_88 = arith.constant 0.000000e+00 : f32
    %455 = vector.broadcast %cst_88 : f32 to vector<1x384xf32>
    %456 = arith.select %454, %445, %455 : vector<1x384xi1>, vector<1x384xf32>
    %457 = arith.addf %374, %456 : vector<1x384xf32>
    %cst_89 = arith.constant 0.000000e+00 : f32
    %458 = vector.broadcast %cst_89 : f32 to vector<1x384xf32>
    %c382_i32 = arith.constant 382 : i32
    %459 = tpu.dynamic_rotate %24 by %c382_i32 dim 1 : vector<1x384xf32>, i32 -> vector<1x384xf32>
    %c5 = arith.constant 5 : index
    %460 = memref.load %arg1[%c5] : memref<98xf32, #tpu.memory_space<smem>>
    %461 = vector.broadcast %460 : f32 to vector<1x384xf32>
    %462 = arith.mulf %459, %461 : vector<1x384xf32>
    %463 = arith.addf %458, %462 : vector<1x384xf32>
    %c366_i32 = arith.constant 366 : i32
    %464 = tpu.dynamic_rotate %24 by %c366_i32 dim 1 : vector<1x384xf32>, i32 -> vector<1x384xf32>
    %c12 = arith.constant 12 : index
    %465 = memref.load %arg1[%c12] : memref<98xf32, #tpu.memory_space<smem>>
    %466 = vector.broadcast %465 : f32 to vector<1x384xf32>
    %467 = arith.mulf %464, %466 : vector<1x384xf32>
    %468 = arith.addf %463, %467 : vector<1x384xf32>
    %c350_i32 = arith.constant 350 : i32
    %469 = tpu.dynamic_rotate %24 by %c350_i32 dim 1 : vector<1x384xf32>, i32 -> vector<1x384xf32>
    %c19 = arith.constant 19 : index
    %470 = memref.load %arg1[%c19] : memref<98xf32, #tpu.memory_space<smem>>
    %471 = vector.broadcast %470 : f32 to vector<1x384xf32>
    %472 = arith.mulf %469, %471 : vector<1x384xf32>
    %473 = arith.addf %468, %472 : vector<1x384xf32>
    %c334_i32 = arith.constant 334 : i32
    %474 = tpu.dynamic_rotate %24 by %c334_i32 dim 1 : vector<1x384xf32>, i32 -> vector<1x384xf32>
    %c26 = arith.constant 26 : index
    %475 = memref.load %arg1[%c26] : memref<98xf32, #tpu.memory_space<smem>>
    %476 = vector.broadcast %475 : f32 to vector<1x384xf32>
    %477 = arith.mulf %474, %476 : vector<1x384xf32>
    %478 = arith.addf %473, %477 : vector<1x384xf32>
    %c318_i32 = arith.constant 318 : i32
    %479 = tpu.dynamic_rotate %24 by %c318_i32 dim 1 : vector<1x384xf32>, i32 -> vector<1x384xf32>
    %c33 = arith.constant 33 : index
    %480 = memref.load %arg1[%c33] : memref<98xf32, #tpu.memory_space<smem>>
    %481 = vector.broadcast %480 : f32 to vector<1x384xf32>
    %482 = arith.mulf %479, %481 : vector<1x384xf32>
    %483 = arith.addf %478, %482 : vector<1x384xf32>
    %c302_i32 = arith.constant 302 : i32
    %484 = tpu.dynamic_rotate %24 by %c302_i32 dim 1 : vector<1x384xf32>, i32 -> vector<1x384xf32>
    %c40 = arith.constant 40 : index
    %485 = memref.load %arg1[%c40] : memref<98xf32, #tpu.memory_space<smem>>
    %486 = vector.broadcast %485 : f32 to vector<1x384xf32>
    %487 = arith.mulf %484, %486 : vector<1x384xf32>
    %488 = arith.addf %483, %487 : vector<1x384xf32>
    %c286_i32 = arith.constant 286 : i32
    %489 = tpu.dynamic_rotate %24 by %c286_i32 dim 1 : vector<1x384xf32>, i32 -> vector<1x384xf32>
    %c47 = arith.constant 47 : index
    %490 = memref.load %arg1[%c47] : memref<98xf32, #tpu.memory_space<smem>>
    %491 = vector.broadcast %490 : f32 to vector<1x384xf32>
    %492 = arith.mulf %489, %491 : vector<1x384xf32>
    %493 = arith.addf %488, %492 : vector<1x384xf32>
    %c382_i32_90 = arith.constant 382 : i32
    %494 = tpu.dynamic_rotate %26 by %c382_i32_90 dim 1 : vector<1x384xf32>, i32 -> vector<1x384xf32>
    %c54 = arith.constant 54 : index
    %495 = memref.load %arg1[%c54] : memref<98xf32, #tpu.memory_space<smem>>
    %496 = vector.broadcast %495 : f32 to vector<1x384xf32>
    %497 = arith.mulf %494, %496 : vector<1x384xf32>
    %498 = arith.addf %493, %497 : vector<1x384xf32>
    %c366_i32_91 = arith.constant 366 : i32
    %499 = tpu.dynamic_rotate %26 by %c366_i32_91 dim 1 : vector<1x384xf32>, i32 -> vector<1x384xf32>
    %c61 = arith.constant 61 : index
    %500 = memref.load %arg1[%c61] : memref<98xf32, #tpu.memory_space<smem>>
    %501 = vector.broadcast %500 : f32 to vector<1x384xf32>
    %502 = arith.mulf %499, %501 : vector<1x384xf32>
    %503 = arith.addf %498, %502 : vector<1x384xf32>
    %c350_i32_92 = arith.constant 350 : i32
    %504 = tpu.dynamic_rotate %26 by %c350_i32_92 dim 1 : vector<1x384xf32>, i32 -> vector<1x384xf32>
    %c68 = arith.constant 68 : index
    %505 = memref.load %arg1[%c68] : memref<98xf32, #tpu.memory_space<smem>>
    %506 = vector.broadcast %505 : f32 to vector<1x384xf32>
    %507 = arith.mulf %504, %506 : vector<1x384xf32>
    %508 = arith.addf %503, %507 : vector<1x384xf32>
    %c334_i32_93 = arith.constant 334 : i32
    %509 = tpu.dynamic_rotate %26 by %c334_i32_93 dim 1 : vector<1x384xf32>, i32 -> vector<1x384xf32>
    %c75 = arith.constant 75 : index
    %510 = memref.load %arg1[%c75] : memref<98xf32, #tpu.memory_space<smem>>
    %511 = vector.broadcast %510 : f32 to vector<1x384xf32>
    %512 = arith.mulf %509, %511 : vector<1x384xf32>
    %513 = arith.addf %508, %512 : vector<1x384xf32>
    %c318_i32_94 = arith.constant 318 : i32
    %514 = tpu.dynamic_rotate %26 by %c318_i32_94 dim 1 : vector<1x384xf32>, i32 -> vector<1x384xf32>
    %c82 = arith.constant 82 : index
    %515 = memref.load %arg1[%c82] : memref<98xf32, #tpu.memory_space<smem>>
    %516 = vector.broadcast %515 : f32 to vector<1x384xf32>
    %517 = arith.mulf %514, %516 : vector<1x384xf32>
    %518 = arith.addf %513, %517 : vector<1x384xf32>
    %c302_i32_95 = arith.constant 302 : i32
    %519 = tpu.dynamic_rotate %26 by %c302_i32_95 dim 1 : vector<1x384xf32>, i32 -> vector<1x384xf32>
    %c89 = arith.constant 89 : index
    %520 = memref.load %arg1[%c89] : memref<98xf32, #tpu.memory_space<smem>>
    %521 = vector.broadcast %520 : f32 to vector<1x384xf32>
    %522 = arith.mulf %519, %521 : vector<1x384xf32>
    %523 = arith.addf %518, %522 : vector<1x384xf32>
    %c286_i32_96 = arith.constant 286 : i32
    %524 = tpu.dynamic_rotate %26 by %c286_i32_96 dim 1 : vector<1x384xf32>, i32 -> vector<1x384xf32>
    %c96 = arith.constant 96 : index
    %525 = memref.load %arg1[%c96] : memref<98xf32, #tpu.memory_space<smem>>
    %526 = vector.broadcast %525 : f32 to vector<1x384xf32>
    %527 = arith.mulf %524, %526 : vector<1x384xf32>
    %528 = arith.addf %523, %527 : vector<1x384xf32>
    %c2_i32_97 = arith.constant 2 : i32
    %529 = vector.broadcast %c2_i32_97 : i32 to vector<1x384xi32>
    %530 = arith.addi %43, %529 : vector<1x384xi32>
    %c0_i32_98 = arith.constant 0 : i32
    %531 = vector.broadcast %c0_i32_98 : i32 to vector<1x384xi32>
    %532 = arith.cmpi sge, %530, %531 : vector<1x384xi32>
    %c2_i32_99 = arith.constant 2 : i32
    %533 = vector.broadcast %c2_i32_99 : i32 to vector<1x384xi32>
    %534 = arith.addi %43, %533 : vector<1x384xi32>
    %c16_i32_100 = arith.constant 16 : i32
    %535 = vector.broadcast %c16_i32_100 : i32 to vector<1x384xi32>
    %536 = arith.cmpi slt, %534, %535 : vector<1x384xi32>
    %537 = arith.andi %532, %536 : vector<1x384xi1>
    %cst_101 = arith.constant 0.000000e+00 : f32
    %538 = vector.broadcast %cst_101 : f32 to vector<1x384xf32>
    %539 = arith.select %537, %528, %538 : vector<1x384xi1>, vector<1x384xf32>
    %540 = arith.addf %457, %539 : vector<1x384xf32>
    %cst_102 = arith.constant 0.000000e+00 : f32
    %541 = vector.broadcast %cst_102 : f32 to vector<1x384xf32>
    %c381_i32 = arith.constant 381 : i32
    %542 = tpu.dynamic_rotate %24 by %c381_i32 dim 1 : vector<1x384xf32>, i32 -> vector<1x384xf32>
    %c6 = arith.constant 6 : index
    %543 = memref.load %arg1[%c6] : memref<98xf32, #tpu.memory_space<smem>>
    %544 = vector.broadcast %543 : f32 to vector<1x384xf32>
    %545 = arith.mulf %542, %544 : vector<1x384xf32>
    %546 = arith.addf %541, %545 : vector<1x384xf32>
    %c365_i32 = arith.constant 365 : i32
    %547 = tpu.dynamic_rotate %24 by %c365_i32 dim 1 : vector<1x384xf32>, i32 -> vector<1x384xf32>
    %c13 = arith.constant 13 : index
    %548 = memref.load %arg1[%c13] : memref<98xf32, #tpu.memory_space<smem>>
    %549 = vector.broadcast %548 : f32 to vector<1x384xf32>
    %550 = arith.mulf %547, %549 : vector<1x384xf32>
    %551 = arith.addf %546, %550 : vector<1x384xf32>
    %c349_i32 = arith.constant 349 : i32
    %552 = tpu.dynamic_rotate %24 by %c349_i32 dim 1 : vector<1x384xf32>, i32 -> vector<1x384xf32>
    %c20 = arith.constant 20 : index
    %553 = memref.load %arg1[%c20] : memref<98xf32, #tpu.memory_space<smem>>
    %554 = vector.broadcast %553 : f32 to vector<1x384xf32>
    %555 = arith.mulf %552, %554 : vector<1x384xf32>
    %556 = arith.addf %551, %555 : vector<1x384xf32>
    %c333_i32 = arith.constant 333 : i32
    %557 = tpu.dynamic_rotate %24 by %c333_i32 dim 1 : vector<1x384xf32>, i32 -> vector<1x384xf32>
    %c27 = arith.constant 27 : index
    %558 = memref.load %arg1[%c27] : memref<98xf32, #tpu.memory_space<smem>>
    %559 = vector.broadcast %558 : f32 to vector<1x384xf32>
    %560 = arith.mulf %557, %559 : vector<1x384xf32>
    %561 = arith.addf %556, %560 : vector<1x384xf32>
    %c317_i32 = arith.constant 317 : i32
    %562 = tpu.dynamic_rotate %24 by %c317_i32 dim 1 : vector<1x384xf32>, i32 -> vector<1x384xf32>
    %c34 = arith.constant 34 : index
    %563 = memref.load %arg1[%c34] : memref<98xf32, #tpu.memory_space<smem>>
    %564 = vector.broadcast %563 : f32 to vector<1x384xf32>
    %565 = arith.mulf %562, %564 : vector<1x384xf32>
    %566 = arith.addf %561, %565 : vector<1x384xf32>
    %c301_i32 = arith.constant 301 : i32
    %567 = tpu.dynamic_rotate %24 by %c301_i32 dim 1 : vector<1x384xf32>, i32 -> vector<1x384xf32>
    %c41 = arith.constant 41 : index
    %568 = memref.load %arg1[%c41] : memref<98xf32, #tpu.memory_space<smem>>
    %569 = vector.broadcast %568 : f32 to vector<1x384xf32>
    %570 = arith.mulf %567, %569 : vector<1x384xf32>
    %571 = arith.addf %566, %570 : vector<1x384xf32>
    %c285_i32 = arith.constant 285 : i32
    %572 = tpu.dynamic_rotate %24 by %c285_i32 dim 1 : vector<1x384xf32>, i32 -> vector<1x384xf32>
    %c48_103 = arith.constant 48 : index
    %573 = memref.load %arg1[%c48_103] : memref<98xf32, #tpu.memory_space<smem>>
    %574 = vector.broadcast %573 : f32 to vector<1x384xf32>
    %575 = arith.mulf %572, %574 : vector<1x384xf32>
    %576 = arith.addf %571, %575 : vector<1x384xf32>
    %c381_i32_104 = arith.constant 381 : i32
    %577 = tpu.dynamic_rotate %26 by %c381_i32_104 dim 1 : vector<1x384xf32>, i32 -> vector<1x384xf32>
    %c55 = arith.constant 55 : index
    %578 = memref.load %arg1[%c55] : memref<98xf32, #tpu.memory_space<smem>>
    %579 = vector.broadcast %578 : f32 to vector<1x384xf32>
    %580 = arith.mulf %577, %579 : vector<1x384xf32>
    %581 = arith.addf %576, %580 : vector<1x384xf32>
    %c365_i32_105 = arith.constant 365 : i32
    %582 = tpu.dynamic_rotate %26 by %c365_i32_105 dim 1 : vector<1x384xf32>, i32 -> vector<1x384xf32>
    %c62 = arith.constant 62 : index
    %583 = memref.load %arg1[%c62] : memref<98xf32, #tpu.memory_space<smem>>
    %584 = vector.broadcast %583 : f32 to vector<1x384xf32>
    %585 = arith.mulf %582, %584 : vector<1x384xf32>
    %586 = arith.addf %581, %585 : vector<1x384xf32>
    %c349_i32_106 = arith.constant 349 : i32
    %587 = tpu.dynamic_rotate %26 by %c349_i32_106 dim 1 : vector<1x384xf32>, i32 -> vector<1x384xf32>
    %c69 = arith.constant 69 : index
    %588 = memref.load %arg1[%c69] : memref<98xf32, #tpu.memory_space<smem>>
    %589 = vector.broadcast %588 : f32 to vector<1x384xf32>
    %590 = arith.mulf %587, %589 : vector<1x384xf32>
    %591 = arith.addf %586, %590 : vector<1x384xf32>
    %c333_i32_107 = arith.constant 333 : i32
    %592 = tpu.dynamic_rotate %26 by %c333_i32_107 dim 1 : vector<1x384xf32>, i32 -> vector<1x384xf32>
    %c76 = arith.constant 76 : index
    %593 = memref.load %arg1[%c76] : memref<98xf32, #tpu.memory_space<smem>>
    %594 = vector.broadcast %593 : f32 to vector<1x384xf32>
    %595 = arith.mulf %592, %594 : vector<1x384xf32>
    %596 = arith.addf %591, %595 : vector<1x384xf32>
    %c317_i32_108 = arith.constant 317 : i32
    %597 = tpu.dynamic_rotate %26 by %c317_i32_108 dim 1 : vector<1x384xf32>, i32 -> vector<1x384xf32>
    %c83 = arith.constant 83 : index
    %598 = memref.load %arg1[%c83] : memref<98xf32, #tpu.memory_space<smem>>
    %599 = vector.broadcast %598 : f32 to vector<1x384xf32>
    %600 = arith.mulf %597, %599 : vector<1x384xf32>
    %601 = arith.addf %596, %600 : vector<1x384xf32>
    %c301_i32_109 = arith.constant 301 : i32
    %602 = tpu.dynamic_rotate %26 by %c301_i32_109 dim 1 : vector<1x384xf32>, i32 -> vector<1x384xf32>
    %c90 = arith.constant 90 : index
    %603 = memref.load %arg1[%c90] : memref<98xf32, #tpu.memory_space<smem>>
    %604 = vector.broadcast %603 : f32 to vector<1x384xf32>
    %605 = arith.mulf %602, %604 : vector<1x384xf32>
    %606 = arith.addf %601, %605 : vector<1x384xf32>
    %c285_i32_110 = arith.constant 285 : i32
    %607 = tpu.dynamic_rotate %26 by %c285_i32_110 dim 1 : vector<1x384xf32>, i32 -> vector<1x384xf32>
    %c97 = arith.constant 97 : index
    %608 = memref.load %arg1[%c97] : memref<98xf32, #tpu.memory_space<smem>>
    %609 = vector.broadcast %608 : f32 to vector<1x384xf32>
    %610 = arith.mulf %607, %609 : vector<1x384xf32>
    %611 = arith.addf %606, %610 : vector<1x384xf32>
    %c3_i32_111 = arith.constant 3 : i32
    %612 = vector.broadcast %c3_i32_111 : i32 to vector<1x384xi32>
    %613 = arith.addi %43, %612 : vector<1x384xi32>
    %c0_i32_112 = arith.constant 0 : i32
    %614 = vector.broadcast %c0_i32_112 : i32 to vector<1x384xi32>
    %615 = arith.cmpi sge, %613, %614 : vector<1x384xi32>
    %c3_i32_113 = arith.constant 3 : i32
    %616 = vector.broadcast %c3_i32_113 : i32 to vector<1x384xi32>
    %617 = arith.addi %43, %616 : vector<1x384xi32>
    %c16_i32_114 = arith.constant 16 : i32
    %618 = vector.broadcast %c16_i32_114 : i32 to vector<1x384xi32>
    %619 = arith.cmpi slt, %617, %618 : vector<1x384xi32>
    %620 = arith.andi %615, %619 : vector<1x384xi1>
    %cst_115 = arith.constant 0.000000e+00 : f32
    %621 = vector.broadcast %cst_115 : f32 to vector<1x384xf32>
    %622 = arith.select %620, %611, %621 : vector<1x384xi1>, vector<1x384xf32>
    %623 = arith.addf %540, %622 : vector<1x384xf32>
    %624 = arith.negf %623 : vector<1x384xf32>
    %625 = math.exp %624 : vector<1x384xf32>
    %cst_116 = arith.constant 1.000000e+00 : f32
    %626 = vector.broadcast %cst_116 : f32 to vector<1x384xf32>
    %627 = arith.addf %626, %625 : vector<1x384xf32>
    %628 = arith.divf %626, %627 : vector<1x384xf32>
    %629 = vector.extract_strided_slice %628 {offsets = [0, 0], sizes = [1, 256], strides = [1, 1]} : vector<1x384xf32> to vector<1x256xf32>
    %630 = vector.shape_cast %629 : vector<1x256xf32> to vector<1x256xf32>
    %631 = vector.broadcast %630 : vector<1x256xf32> to vector<4x256xf32>
    %c0_i32_117 = arith.constant 0 : i32
    %c4_i32_118 = arith.constant 4 : i32
    %632 = arith.muli %c0_i32_117, %c4_i32_118 : i32
    %633 = tpu.assume_multiple %632, 4 : i32
    %c0_119 = arith.constant 0 : index
    %634 = arith.index_cast %633 : i32 to index
    %c0_120 = arith.constant 0 : index
    %635 = vector.load %arg2[%c0_119, %634, %c0_120] : memref<1x4x256xf32, #tpu.memory_space<vmem>>, vector<1x4x256xf32>
    %636 = vector.shape_cast %635 : vector<1x4x256xf32> to vector<4x256xf32>
    %637 = arith.mulf %636, %631 : vector<4x256xf32>
    %c0_121 = arith.constant 0 : index
    %638 = arith.index_cast %633 : i32 to index
    %c0_122 = arith.constant 0 : index
    %639 = vector.load %arg3[%c0_121, %638, %c0_122] : memref<1x4x256xf32, #tpu.memory_space<vmem>>, vector<1x4x256xf32>
    %640 = vector.shape_cast %639 : vector<1x4x256xf32> to vector<4x256xf32>
    %641 = vector.shape_cast %637 : vector<4x256xf32> to vector<1x4x256xf32>
    tpu.vector_store %arg3[%c0_121, %638, %c0_122], %641 {strides = array<i32>} : memref<1x4x256xf32, #tpu.memory_space<vmem>>, vector<1x4x256xf32>,
    %c1_i32_123 = arith.constant 1 : i32
    return
  }
  func.func @transform_0(%arg0: i32) -> i32 {
    %c0_i32 = arith.constant 0 : i32
    %c0_i32_0 = arith.constant 0 : i32
    return %c0_i32 : i32
  }
  func.func @transform_1(%arg0: i32) -> (i32, i32, i32) {
    %c0_i32 = arith.constant 0 : i32
    %c0_i32_0 = arith.constant 0 : i32
    %c0_i32_1 = arith.constant 0 : i32
    return %arg0, %c0_i32, %c0_i32_0 : i32, i32, i32
  }
  func.func @transform_2(%arg0: i32) -> (i32, i32, i32) {
    %c0_i32 = arith.constant 0 : i32
    %c0_i32_0 = arith.constant 0 : i32
    %c0_i32_1 = arith.constant 0 : i32
    return %arg0, %c0_i32, %c0_i32_0 : i32, i32, i32
  }
}

</mosaic_0001>

<llo_original>
// kernel: tpu_custom_call.1
$region0: #{tpu_custom_call.1}
  #allocation0 [shape = 'u32[]', space=smem, size = 0x4, offset = 0x4, fixed_abs, tag = 'smem constant byte address 0x4 - core index']
  #allocation1 [shape = 'u32[72,128]{1,0:T(1,128)}', space=vmem, size = 0x9000, scoped, tag = 'internal scratch']
  #allocation2 [shape = 'f32[2,1,384]{2,1,0:T(1,128)}', space=vmem, size = 0xc00, scoped, tag = 'scratch operand']
  %s0 = inlined_call_operand.hbm [shape: f32[98], index: 0, kind: input, shape index: {}]
  %s1 = inlined_call_operand.hbm [shape: f32[2,4,256], index: 1, kind: input, shape index: {}]
  %s2 = inlined_call_operand.hbm [shape: f32[2,4,256], index: 2, kind: output, shape index: {}]
  %s3 = sld [smem:[#allocation0]]
  $region49: #{tpu_custom_call.1} parent=0
    _
  %s5 = ssub.s32 1, %s3
  %s6 = scalar_select 0, %s5, %s3
  $region1: #{tpu_custom_call.1} parent=0
    #allocation3 [shape = 'u8[512]{0}', space=smem, size = 0x200, scoped, tag = 'input window, operand 0, single buffered']
    #allocation4 [shape = 's32[2]{0}', space=sflag, size = 0x8, scoped, tag = 'scoped memory for tpu_custom_call.1']
    #allocation5 [shape = 's32[2]{0}', space=sflag, size = 0x8, scoped, tag = 'scoped memory for tpu_custom_call.1']
    #allocation6 [shape = 's32[2]{0}', space=sflag, size = 0x8, scoped, tag = 'scoped memory for tpu_custom_call.1']
    #allocation7 [shape = 'u8[8192]{0}', space=vmem, size = 0x2000, scoped, tag = 'input window, operand 1']
    #allocation8 [shape = 'u8[8192]{0}', space=vmem, size = 0x2000, scoped, tag = 'output window, operand 0']
    %7 = vsyncpa [#allocation6], 0
    %8 = vsyncpa [#allocation4], 0
    %s9 = scalar_lea.sflag [#allocation4], 1
    %10 = vsyncpa %s9, 0
    %11 = vsyncpa [#allocation5], 0
    %s12 = scalar_lea.sflag [#allocation5], 1
    %13 = vsyncpa %s12, 0
    loop: start=0, step=1, limit=4
    $region2: #{tpu_custom_call.1} parent=1 // loop_pre_header
      _
    $region3: #{tpu_custom_call.1} parent=1 // loop_header
      %s15 = sphi 0, %s19
      %p16 = scmp.ge.s32.totalorder %s15, 4
      %s23 = sphi 0, %s23
      %s25 = sphi 0, %s23
      %s26 = sphi 0, %s25
      %s40 = sphi 0, %s26
      %s46 = sphi 0, %s48
      %s49 = sphi 0, %s46
      %s50 = sphi 0, %s49
      %s66 = sphi 0, %s50
      %s72 = sphi 0, %s74
      %s75 = sphi 0, %s72
      %s76 = sphi 0, %s75
      %s92 = sphi 0, %s76
    $region4: #{tpu_custom_call.1} parent=1 // loop_header_branch
      %18 = sbr.rel (%p16) target = $region8
    $region5: #{tpu_custom_call.1} parent=1 // loop_body
      %s20 = ssub.s32 %s15, 1
      %s21 = ssub.s32 %s15, 2
      %s22 = sadd.s32 %s15, 1
      %s24 = sadd.s32 %s23, 1
      %p27 = scmp.eq.s32.totalorder %s15, 1
      %p28 = scmp.ne.s32.totalorder %s23, %s25
      %p29 = scmp.eq.s32.totalorder %s15, 0
      %p30 = por %p28, %p29
      %p31 = scmp.ne.s32.totalorder %s23, %s25
      %p32 = scmp.eq.s32.totalorder %s20, 1
      %p33 = por %p31, %p32
      %p34 = scmp.ne.s32.totalorder %s25, %s26
      %p35 = scmp.eq.s32.totalorder %s20, 0
      %p36 = por %p34, %p35
      %p37 = scmp.ne.s32.totalorder %s25, %s26
      %p38 = scmp.eq.s32.totalorder %s21, 1
      %p39 = por %p37, %p38
      %p41 = scmp.ne.s32.totalorder %s26, %s40
      %p42 = scmp.eq.s32.totalorder %s21, 0
      %p43 = por %p41, %p42
      %s44 = ssub.s32 %s15, %s22
      %p45 = scmp.eq.s32.totalorder %s44, 0
      %s47 = sadd.s32 %s46, 1
      %s48 = scalar_select %p45, %s46, %s47
      %p51 = pneg %p45
      %p52 = scmp.eq.s32.totalorder %s15, 1
      %p53 = por %p51, %p52
      %p54 = scmp.ne.s32.totalorder %s46, %s49
      %p55 = scmp.eq.s32.totalorder %s15, 0
      %p56 = por %p54, %p55
      %p57 = scmp.ne.s32.totalorder %s46, %s49
      %p58 = scmp.eq.s32.totalorder %s20, 1
      %p59 = por %p57, %p58
      %p60 = scmp.ne.s32.totalorder %s49, %s50
      %p61 = scmp.eq.s32.totalorder %s20, 0
      %p62 = por %p60, %p61
      %p63 = scmp.ne.s32.totalorder %s49, %s50
      %p64 = scmp.eq.s32.totalorder %s21, 1
      %p65 = por %p63, %p64
      %p67 = scmp.ne.s32.totalorder %s50, %s66
      %p68 = scmp.eq.s32.totalorder %s21, 0
      %p69 = por %p67, %p68
      %s70 = ssub.s32 %s15, %s22
      %p71 = scmp.eq.s32.totalorder %s70, 0
      %s73 = sadd.s32 %s72, 1
      %s74 = scalar_select %p71, %s72, %s73
      %p77 = pneg %p71
      %p78 = scmp.eq.s32.totalorder %s15, 1
      %p79 = por %p77, %p78
      %p80 = scmp.ne.s32.totalorder %s72, %s75
      %p81 = scmp.eq.s32.totalorder %s15, 0
      %p82 = por %p80, %p81
      %p83 = scmp.ne.s32.totalorder %s72, %s75
      %p84 = scmp.eq.s32.totalorder %s20, 1
      %p85 = por %p83, %p84
      %p86 = scmp.ne.s32.totalorder %s75, %s76
      %p87 = scmp.eq.s32.totalorder %s20, 0
      %p88 = por %p86, %p87
      %p89 = scmp.ne.s32.totalorder %s75, %s76
      %p90 = scmp.eq.s32.totalorder %s21, 1
      %p91 = por %p89, %p90
      %p93 = scmp.ne.s32.totalorder %s76, %s92
      %p94 = scmp.eq.s32.totalorder %s21, 0
      %p95 = por %p93, %p94
      %p96 = scmp.le.s32.totalorder 1, %s15
      %p97 = scmp.lt.s32.totalorder %s15, 3
      %p98 = pnand %p96, %p97
      %p99 = pneg %p98
      // Predicated region
      $region9: #{tpu_custom_call.1} parent=5 // pred_check
        _
      $region10: #{tpu_custom_call.1} parent=5 // pred_check_branch
        %101 = sbr.rel (%p98) target = $region12
      $region11: #{tpu_custom_call.1} parent=5 // pred_region
        %s102 = ssub.s32 %s15, 1
        // Predicated region
        $region13: #{tpu_custom_call.1} parent=11 // pred_check
          %p103 = pneg %p36
        $region14: #{tpu_custom_call.1} parent=11 // pred_check_branch
          %105 = sbr.rel (%p103) target = $region16
        $region15: #{tpu_custom_call.1} parent=11 // pred_region
          %107 = vsyncadd [#allocation6], 0
          %s109 = sshll.u32 %s0, 4
          %s110 = int_to_ptr.hbm [resolvable:$true] %s109
          %112 = dma.hbm_to_smem %s110, 16, [#allocation3], [#allocation6]
        $region16: #{tpu_custom_call.1} parent=11 // pred_fallthru
          _
      $region12: #{tpu_custom_call.1} parent=5 // pred_fallthru
        _
      %p113 = scmp.lt.s32.totalorder %s15, 2
      // Predicated region
      $region17: #{tpu_custom_call.1} parent=5 // pred_check
        %p114 = pneg %p113
      $region18: #{tpu_custom_call.1} parent=5 // pred_check_branch
        %116 = sbr.rel (%p114) target = $region20
      $region19: #{tpu_custom_call.1} parent=5 // pred_region
        // Predicated region
        $region21: #{tpu_custom_call.1} parent=19 // pred_check
          %p117 = pneg %p56
        $region22: #{tpu_custom_call.1} parent=19 // pred_check_branch
          %119 = sbr.rel (%p117) target = $region24
        $region23: #{tpu_custom_call.1} parent=19 // pred_region
          %s120 = sand.u32 %s46, 1
          %s121 = scalar_lea.sflag [#allocation4], %s120
          %s122 = sand.u32 %s46, 1
          %s123 = smul.addr %s122, 8
          %s124 = scalar_lea.vmem [#allocation7], %s123
          %126 = vsyncadd %s121, 0
          %s127 = smul.addr %s15, 2
          %s128 = smul.addr %s127, 4
          %s129 = scalar_lea.hbm %s1, %s128
          %s131 = sshll.u32 %s129, 4
          %s132 = int_to_ptr.hbm [resolvable:$true] %s131
          %s133 = sshll.u32 %s124, 4
          %s134 = int_to_ptr.vmem [resolvable:$true] %s133
          %136 = dma.hbm_to_vmem [thread:$0]  %s132, 128, %s134, %s121
        $region24: #{tpu_custom_call.1} parent=19 // pred_fallthru
          _
      $region20: #{tpu_custom_call.1} parent=5 // pred_fallthru
        _
      %p137 = scmp.le.s32.totalorder 1, %s15
      %p138 = scmp.lt.s32.totalorder %s15, 3
      %p139 = pnand %p137, %p138
      %p140 = pneg %p139
      // Predicated region
      $region25: #{tpu_custom_call.1} parent=5 // pred_check
        _
      $region26: #{tpu_custom_call.1} parent=5 // pred_check_branch
        %142 = sbr.rel (%p139) target = $region28
      $region27: #{tpu_custom_call.1} parent=5 // pred_region
        %s143 = ssub.s32 %s15, 1
        // Predicated region
        $region29: #{tpu_custom_call.1} parent=27 // pred_check
          %p144 = pneg %p36
        $region30: #{tpu_custom_call.1} parent=27 // pred_check_branch
          %146 = sbr.rel (%p144) target = $region32
        $region31: #{tpu_custom_call.1} parent=27 // pred_region
          %148 = dma.done [#allocation6], 16
        $region32: #{tpu_custom_call.1} parent=27 // pred_fallthru
          _
        %s149 = sand.u32 %s49, 1
        %s150 = scalar_lea.sflag [#allocation4], %s149
        %s151 = sand.u32 %s49, 1
        %s152 = smul.addr %s151, 8
        %s153 = scalar_lea.vmem [#allocation7], %s152
        // Predicated region
        $region33: #{tpu_custom_call.1} parent=27 // pred_check
          %p154 = pneg %p62
        $region34: #{tpu_custom_call.1} parent=27 // pred_check_branch
          %156 = sbr.rel (%p154) target = $region36
        $region35: #{tpu_custom_call.1} parent=27 // pred_region
          %158 = dma.done %s150, 128
        $region36: #{tpu_custom_call.1} parent=27 // pred_fallthru
          _
        %159 = sfence
        %p160 = pneg %p36
        %p161 = pneg %p33
        %s162 = sand.u32 %s49, 1
        %s163 = scalar_lea.sflag [#allocation4], %s162
        %s164 = sand.u32 %s49, 1
        %s165 = smul.addr %s164, 8
        %s166 = scalar_lea.vmem [#allocation7], %s165
        %p167 = pneg %p62
        %p168 = pneg %p59
        %p169 = pneg %p88
        %p170 = pneg %p85
        %s171 = sand.u32 %s75, 1
        %s172 = scalar_lea.sflag [#allocation5], %s171
        %s173 = sand.u32 %s75, 1
        %s174 = smul.addr %s173, 8
        %s175 = scalar_lea.vmem [#allocation8], %s174
        %s176 = smul.u32 0, 2
        %s177 = smul.addr %s176, 4
        %s178 = scalar_lea.vmem %s153, %s177 [#allocation7]
        %v179 = vld [vmem:[%s178] sm:$0xff]
        %181 = vst [vmem:[#allocation1] ss:$2 sm:$0xff] %v179
        %v182 = vld.sshfl [vmem:[#allocation1] sm:$0xff pattern:$0x75316420]
        %v183 = vld.sshfl [vmem:[#allocation1 + $0x8] sm:$0xff pattern:$0x75316420]
        %vm186 = vcmask 1043456
        %v187 = vsel %vm186, %v182, 0.0
        %v188 = vrot.slane %v187, 4
        %v189 = vadd.f32 %v187, %v188
        %v190 = vrot.slane %v189, 2
        %v191 = vadd.f32 %v189, %v190
        %v192 = vrot.slane %v191, 1
        %v193 = vadd.f32 %v191, %v192
        %v194 = vsel %vm186, %v183, 0.0
        %v195 = vrot.slane %v194, 4
        %v196 = vadd.f32 %v194, %v195
        %v197 = vrot.slane %v196, 2
        %v198 = vadd.f32 %v196, %v197
        %v199 = vrot.slane %v198, 1
        %v200 = vadd.f32 %v198, %v199
        %v201 = vadd.f32 %v193, 0.0
        %v202 = vadd.f32 %v200, 0.0
        %203 = vst [vmem:[#allocation1] ss:$2 sm:$0xff] %v179
        %v204 = vld.sshfl [vmem:[#allocation1] sm:$0xff pattern:$0x75316420]
        %v205 = vld.sshfl [vmem:[#allocation1 + $0x8] sm:$0xff pattern:$0x75316420]
        %v208 = vsel %vm186, %v204, -inf
        %v209 = vrot.slane %v208, 4
        %v210 = vmax.f32 %v208, %v209
        %v211 = vrot.slane %v210, 2
        %v212 = vmax.f32 %v210, %v211
        %v213 = vrot.slane %v212, 1
        %v214 = vmax.f32 %v212, %v213
        %v215 = vsel %vm186, %v205, -inf
        %v216 = vrot.slane %v215, 4
        %v217 = vmax.f32 %v215, %v216
        %v218 = vrot.slane %v217, 2
        %v219 = vmax.f32 %v217, %v218
        %v220 = vrot.slane %v219, 1
        %v221 = vmax.f32 %v219, %v220
        %v222 = vmul.f32 %v201, 0.25
        %v223 = vmul.f32 %v202, 0.25
        %v224 = vlaneseq
        %vm225 = vcmp.ge.s32.totalorder %v224, 0
        %vm226 = vcmp.lt.s32.totalorder %v224, 384
        %vm227 = vmand %vm225, %vm226
        %228 = vst.msk [vmem:[#allocation2] sm:$0x7] %vm227, 0.0
        %229 = vst.msk [vmem:[#allocation2 + $0x3] sm:$0x7] %vm227, 0.0
        %v232 = vrot.slane %v223, 7
        %vm233 = vcmask 1040384
        %v234 = vsel %vm233, %v222, %v232
        %235 = vrot.lane.b32.xlu0 %v234, 48
        %v236 = vpop.permute.xlu0 %235
        %v237 = vrot.slane %v236, 7
        %vm238 = vcmask 392192
        %v239 = vsel %vm238, %v237, %v236
        %vm241 = vcmp.ge.s32.totalorder %v224, 48
        %vm242 = vcmp.lt.s32.totalorder %v224, 304
        %vm243 = vmand %vm241, %vm242
        %244 = vst.msk [vmem:[#allocation2] sm:$0x7] %vm243, %v239
        %v247 = vrot.slane %v221, 7
        %v248 = vsel %vm233, %v214, %v247
        %249 = vrot.lane.b32.xlu0 %v248, 48
        %v250 = vpop.permute.xlu0 %249
        %v251 = vrot.slane %v250, 7
        %v252 = vsel %vm238, %v251, %v250
        %s254 = scalar_lea.vmem [#allocation2], 3
        %255 = vst.msk [vmem:[%s254] sm:$0x7] %vm243, %v252
        %v256 = vld [vmem:[#allocation2] sm:$0x7]
        %v257 = vld [vmem:[%s254] sm:$0x7]
        %v258 = vlaneseq
        %v259 = vand.u32 %v258, 127
        %v260 = vadd.s32 %v259, 128
        %vm261 = vcmp.lt.s32.totalorder %v259, 0
        %v262 = vsub.s32 0, %v259
        %v263 = vsel %vm261, %v262, %v259
        %v264 = vshrl.u32 %v263, 4
        %v265 = vand.u32 %v263, 15
        %v266 = vsub.s32 0, %v265
        %v267 = vsel %vm261, %v266, %v265
        %vm268 = vcmp.lt.s32.totalorder %v260, 0
        %v269 = vsub.s32 0, %v260
        %v270 = vsel %vm268, %v269, %v260
        %v271 = vshrl.u32 %v270, 4
        %v272 = vand.u32 %v270, 15
        %v273 = vsub.s32 0, %v272
        %v274 = vsel %vm268, %v273, %v272
        %vm275 = vcmp.ne.s32.totalorder %v267, 0
        %vm276 = vcmp.ne.s32.totalorder %v274, 0
        %vm277 = vcmp.lt.s32.totalorder %v267, 0
        %vm278 = vcmp.lt.s32.totalorder %v274, 0
        %vm279 = vmand %vm277, %vm275
        %vm280 = vmand %vm278, %vm276
        %v281 = vadd.s32 %v267, 16
        %v282 = vadd.s32 %v274, 16
        %v283 = vsel %vm279, %v281, %v267
        %v284 = vsel %vm280, %v282, %v274
        %v286 = vperm.slane %v256, 0
        %v287 = vperm.slane %v256, 1
        %v288 = vperm.slane %v256, 2
        %292 = vrot.lane.b32.xlu0 %v286, 3
        %v293 = vpop.permute.xlu0 %292
        %294 = vrot.lane.b32.xlu0 %v287, 3
        %v295 = vpop.permute.xlu0 %294
        %296 = vrot.lane.b32.xlu0 %v288, 3
        %v297 = vpop.permute.xlu0 %296
        %vm298 = vcmp.lt.s32.totalorder %v259, 3
        %v299 = vsel %vm298, %v293, %v295
        %v300 = vsel %vm298, %v297, %v293
        %s301 = sld [smem:[#allocation3]]
        %v302 = vstv %s301
        %v303 = vmul.f32 %v300, %v302
        %v304 = vmul.f32 %v299, %v302
        %v305 = vadd.f32 %v303, 0.0
        %v306 = vadd.f32 %v304, 0.0
        %307 = vrot.lane.b32.xlu0 %v286, 115
        %v308 = vpop.permute.xlu0 %307
        %309 = vrot.lane.b32.xlu0 %v287, 115
        %v310 = vpop.permute.xlu0 %309
        %311 = vrot.lane.b32.xlu0 %v288, 115
        %v312 = vpop.permute.xlu0 %311
        %vm313 = vcmp.lt.s32.totalorder %v259, 115
        %v314 = vsel %vm313, %v310, %v312
        %v315 = vsel %vm313, %v308, %v310
        %s316 = sld [smem:[#allocation3 + $0x7]]
        %v317 = vstv %s316
        %v318 = vmul.f32 %v315, %v317
        %v319 = vmul.f32 %v314, %v317
        %v320 = vadd.f32 %v305, %v318
        %v321 = vadd.f32 %v306, %v319
        %322 = vrot.lane.b32.xlu0 %v286, 99
        %v323 = vpop.permute.xlu0 %322
        %324 = vrot.lane.b32.xlu0 %v287, 99
        %v325 = vpop.permute.xlu0 %324
        %326 = vrot.lane.b32.xlu0 %v288, 99
        %v327 = vpop.permute.xlu0 %326
        %vm328 = vcmp.lt.s32.totalorder %v259, 99
        %v329 = vsel %vm328, %v325, %v327
        %v330 = vsel %vm328, %v323, %v325
        %s331 = sld [smem:[#allocation3 + $0xe]]
        %v332 = vstv %s331
        %v333 = vmul.f32 %v330, %v332
        %v334 = vmul.f32 %v329, %v332
        %v335 = vadd.f32 %v320, %v333
        %v336 = vadd.f32 %v321, %v334
        %337 = vrot.lane.b32.xlu0 %v286, 83
        %v338 = vpop.permute.xlu0 %337
        %339 = vrot.lane.b32.xlu0 %v287, 83
        %v340 = vpop.permute.xlu0 %339
        %341 = vrot.lane.b32.xlu0 %v288, 83
        %v342 = vpop.permute.xlu0 %341
        %vm343 = vcmp.lt.s32.totalorder %v259, 83
        %v344 = vsel %vm343, %v340, %v342
        %v345 = vsel %vm343, %v338, %v340
        %s346 = sld [smem:[#allocation3 + $0x15]]
        %v347 = vstv %s346
        %v348 = vmul.f32 %v345, %v347
        %v349 = vmul.f32 %v344, %v347
        %v350 = vadd.f32 %v335, %v348
        %v351 = vadd.f32 %v336, %v349
        %352 = vrot.lane.b32.xlu0 %v286, 67
        %v353 = vpop.permute.xlu0 %352
        %354 = vrot.lane.b32.xlu0 %v287, 67
        %v355 = vpop.permute.xlu0 %354
        %356 = vrot.lane.b32.xlu0 %v288, 67
        %v357 = vpop.permute.xlu0 %356
        %vm358 = vcmp.lt.s32.totalorder %v259, 67
        %v359 = vsel %vm358, %v355, %v357
        %v360 = vsel %vm358, %v353, %v355
        %s361 = sld [smem:[#allocation3 + $0x1c]]
        %v362 = vstv %s361
        %v363 = vmul.f32 %v360, %v362
        %v364 = vmul.f32 %v359, %v362
        %v365 = vadd.f32 %v350, %v363
        %v366 = vadd.f32 %v351, %v364
        %367 = vrot.lane.b32.xlu0 %v286, 51
        %v368 = vpop.permute.xlu0 %367
        %369 = vrot.lane.b32.xlu0 %v287, 51
        %v370 = vpop.permute.xlu0 %369
        %371 = vrot.lane.b32.xlu0 %v288, 51
        %v372 = vpop.permute.xlu0 %371
        %vm373 = vcmp.lt.s32.totalorder %v259, 51
        %v374 = vsel %vm373, %v370, %v372
        %v375 = vsel %vm373, %v368, %v370
        %s376 = sld [smem:[#allocation3 + $0x23]]
        %v377 = vstv %s376
        %v378 = vmul.f32 %v375, %v377
        %v379 = vmul.f32 %v374, %v377
        %v380 = vadd.f32 %v365, %v378
        %v381 = vadd.f32 %v366, %v379
        %382 = vrot.lane.b32.xlu0 %v286, 35
        %v383 = vpop.permute.xlu0 %382
        %384 = vrot.lane.b32.xlu0 %v287, 35
        %v385 = vpop.permute.xlu0 %384
        %386 = vrot.lane.b32.xlu0 %v288, 35
        %v387 = vpop.permute.xlu0 %386
        %vm388 = vcmp.lt.s32.totalorder %v259, 35
        %v389 = vsel %vm388, %v385, %v387
        %v390 = vsel %vm388, %v383, %v385
        %s391 = sld [smem:[#allocation3 + $0x2a]]
        %v392 = vstv %s391
        %v393 = vmul.f32 %v390, %v392
        %v394 = vmul.f32 %v389, %v392
        %v395 = vadd.f32 %v380, %v393
        %v396 = vadd.f32 %v381, %v394
        %v398 = vperm.slane %v257, 0
        %v399 = vperm.slane %v257, 1
        %v400 = vperm.slane %v257, 2
        %404 = vrot.lane.b32.xlu0 %v398, 3
        %v405 = vpop.permute.xlu0 %404
        %406 = vrot.lane.b32.xlu0 %v399, 3
        %v407 = vpop.permute.xlu0 %406
        %408 = vrot.lane.b32.xlu0 %v400, 3
        %v409 = vpop.permute.xlu0 %408
        %v410 = vsel %vm298, %v405, %v407
        %v411 = vsel %vm298, %v409, %v405
        %s412 = sld [smem:[#allocation3 + $0x31]]
        %v413 = vstv %s412
        %v414 = vmul.f32 %v411, %v413
        %v415 = vmul.f32 %v410, %v413
        %v416 = vadd.f32 %v395, %v414
        %v417 = vadd.f32 %v396, %v415
        %418 = vrot.lane.b32.xlu0 %v398, 115
        %v419 = vpop.permute.xlu0 %418
        %420 = vrot.lane.b32.xlu0 %v399, 115
        %v421 = vpop.permute.xlu0 %420
        %422 = vrot.lane.b32.xlu0 %v400, 115
        %v423 = vpop.permute.xlu0 %422
        %v424 = vsel %vm313, %v421, %v423
        %v425 = vsel %vm313, %v419, %v421
        %s426 = sld [smem:[#allocation3 + $0x38]]
        %v427 = vstv %s426
        %v428 = vmul.f32 %v425, %v427
        %v429 = vmul.f32 %v424, %v427
        %v430 = vadd.f32 %v416, %v428
        %v431 = vadd.f32 %v417, %v429
        %432 = vrot.lane.b32.xlu0 %v398, 99
        %v433 = vpop.permute.xlu0 %432
        %434 = vrot.lane.b32.xlu0 %v399, 99
        %v435 = vpop.permute.xlu0 %434
        %436 = vrot.lane.b32.xlu0 %v400, 99
        %v437 = vpop.permute.xlu0 %436
        %v438 = vsel %vm328, %v435, %v437
        %v439 = vsel %vm328, %v433, %v435
        %s440 = sld [smem:[#allocation3 + $0x3f]]
        %v441 = vstv %s440
        %v442 = vmul.f32 %v439, %v441
        %v443 = vmul.f32 %v438, %v441
        %v444 = vadd.f32 %v430, %v442
        %v445 = vadd.f32 %v431, %v443
        %446 = vrot.lane.b32.xlu0 %v398, 83
        %v447 = vpop.permute.xlu0 %446
        %448 = vrot.lane.b32.xlu0 %v399, 83
        %v449 = vpop.permute.xlu0 %448
        %450 = vrot.lane.b32.xlu0 %v400, 83
        %v451 = vpop.permute.xlu0 %450
        %v452 = vsel %vm343, %v449, %v451
        %v453 = vsel %vm343, %v447, %v449
        %s454 = sld [smem:[#allocation3 + $0x46]]
        %v455 = vstv %s454
        %v456 = vmul.f32 %v453, %v455
        %v457 = vmul.f32 %v452, %v455
        %v458 = vadd.f32 %v444, %v456
        %v459 = vadd.f32 %v445, %v457
        %460 = vrot.lane.b32.xlu0 %v398, 67
        %v461 = vpop.permute.xlu0 %460
        %462 = vrot.lane.b32.xlu0 %v399, 67
        %v463 = vpop.permute.xlu0 %462
        %464 = vrot.lane.b32.xlu0 %v400, 67
        %v465 = vpop.permute.xlu0 %464
        %v466 = vsel %vm358, %v463, %v465
        %v467 = vsel %vm358, %v461, %v463
        %s468 = sld [smem:[#allocation3 + $0x4d]]
        %v469 = vstv %s468
        %v470 = vmul.f32 %v467, %v469
        %v471 = vmul.f32 %v466, %v469
        %v472 = vadd.f32 %v458, %v470
        %v473 = vadd.f32 %v459, %v471
        %474 = vrot.lane.b32.xlu0 %v398, 51
        %v475 = vpop.permute.xlu0 %474
        %476 = vrot.lane.b32.xlu0 %v399, 51
        %v477 = vpop.permute.xlu0 %476
        %478 = vrot.lane.b32.xlu0 %v400, 51
        %v479 = vpop.permute.xlu0 %478
        %v480 = vsel %vm373, %v477, %v479
        %v481 = vsel %vm373, %v475, %v477
        %s482 = sld [smem:[#allocation3 + $0x54]]
        %v483 = vstv %s482
        %v484 = vmul.f32 %v481, %v483
        %v485 = vmul.f32 %v480, %v483
        %v486 = vadd.f32 %v472, %v484
        %v487 = vadd.f32 %v473, %v485
        %488 = vrot.lane.b32.xlu0 %v398, 35
        %v489 = vpop.permute.xlu0 %488
        %490 = vrot.lane.b32.xlu0 %v399, 35
        %v491 = vpop.permute.xlu0 %490
        %492 = vrot.lane.b32.xlu0 %v400, 35
        %v493 = vpop.permute.xlu0 %492
        %v494 = vsel %vm388, %v491, %v493
        %v495 = vsel %vm388, %v489, %v491
        %s496 = sld [smem:[#allocation3 + $0x5b]]
        %v497 = vstv %s496
        %v498 = vmul.f32 %v495, %v497
        %v499 = vmul.f32 %v494, %v497
        %v500 = vadd.f32 %v486, %v498
        %v501 = vadd.f32 %v487, %v499
        %v502 = vadd.s32 %v283, 4294967293
        %v503 = vadd.s32 %v284, 4294967293
        %vm504 = vcmp.ge.s32.totalorder %v502, 0
        %vm505 = vcmp.ge.s32.totalorder %v503, 0
        %vm506 = vcmp.lt.s32.totalorder %v502, 16
        %vm507 = vcmp.lt.s32.totalorder %v503, 16
        %vm508 = vmand %vm504, %vm506
        %vm509 = vmand %vm505, %vm507
        %v510 = vsel %vm508, %v500, 0.0
        %v511 = vsel %vm509, %v501, 0.0
        %v512 = vadd.f32 %v510, 0.0
        %v513 = vadd.f32 %v511, 0.0
        %514 = vrot.lane.b32.xlu0 %v286, 2
        %v515 = vpop.permute.xlu0 %514
        %516 = vrot.lane.b32.xlu0 %v287, 2
        %v517 = vpop.permute.xlu0 %516
        %518 = vrot.lane.b32.xlu0 %v288, 2
        %v519 = vpop.permute.xlu0 %518
        %vm520 = vcmp.lt.s32.totalorder %v259, 2
        %v521 = vsel %vm520, %v515, %v517
        %v522 = vsel %vm520, %v519, %v515
        %s523 = sld [smem:[#allocation3 + $0x1]]
        %v524 = vstv %s523
        %v525 = vmul.f32 %v522, %v524
        %v526 = vmul.f32 %v521, %v524
        %v527 = vadd.f32 %v525, 0.0
        %v528 = vadd.f32 %v526, 0.0
        %529 = vrot.lane.b32.xlu0 %v286, 114
        %v530 = vpop.permute.xlu0 %529
        %531 = vrot.lane.b32.xlu0 %v287, 114
        %v532 = vpop.permute.xlu0 %531
        %533 = vrot.lane.b32.xlu0 %v288, 114
        %v534 = vpop.permute.xlu0 %533
        %vm535 = vcmp.lt.s32.totalorder %v259, 114
        %v536 = vsel %vm535, %v532, %v534
        %v537 = vsel %vm535, %v530, %v532
        %s538 = sld [smem:[#allocation3 + $0x8]]
        %v539 = vstv %s538
        %v540 = vmul.f32 %v537, %v539
        %v541 = vmul.f32 %v536, %v539
        %v542 = vadd.f32 %v527, %v540
        %v543 = vadd.f32 %v528, %v541
        %544 = vrot.lane.b32.xlu0 %v286, 98
        %v545 = vpop.permute.xlu0 %544
        %546 = vrot.lane.b32.xlu0 %v287, 98
        %v547 = vpop.permute.xlu0 %546
        %548 = vrot.lane.b32.xlu0 %v288, 98
        %v549 = vpop.permute.xlu0 %548
        %vm550 = vcmp.lt.s32.totalorder %v259, 98
        %v551 = vsel %vm550, %v547, %v549
        %v552 = vsel %vm550, %v545, %v547
        %s553 = sld [smem:[#allocation3 + $0xf]]
        %v554 = vstv %s553
        %v555 = vmul.f32 %v552, %v554
        %v556 = vmul.f32 %v551, %v554
        %v557 = vadd.f32 %v542, %v555
        %v558 = vadd.f32 %v543, %v556
        %559 = vrot.lane.b32.xlu0 %v286, 82
        %v560 = vpop.permute.xlu0 %559
        %561 = vrot.lane.b32.xlu0 %v287, 82
        %v562 = vpop.permute.xlu0 %561
        %563 = vrot.lane.b32.xlu0 %v288, 82
        %v564 = vpop.permute.xlu0 %563
        %vm565 = vcmp.lt.s32.totalorder %v259, 82
        %v566 = vsel %vm565, %v562, %v564
        %v567 = vsel %vm565, %v560, %v562
        %s568 = sld [smem:[#allocation3 + $0x16]]
        %v569 = vstv %s568
        %v570 = vmul.f32 %v567, %v569
        %v571 = vmul.f32 %v566, %v569
        %v572 = vadd.f32 %v557, %v570
        %v573 = vadd.f32 %v558, %v571
        %574 = vrot.lane.b32.xlu0 %v286, 66
        %v575 = vpop.permute.xlu0 %574
        %576 = vrot.lane.b32.xlu0 %v287, 66
        %v577 = vpop.permute.xlu0 %576
        %578 = vrot.lane.b32.xlu0 %v288, 66
        %v579 = vpop.permute.xlu0 %578
        %vm580 = vcmp.lt.s32.totalorder %v259, 66
        %v581 = vsel %vm580, %v577, %v579
        %v582 = vsel %vm580, %v575, %v577
        %s583 = sld [smem:[#allocation3 + $0x1d]]
        %v584 = vstv %s583
        %v585 = vmul.f32 %v582, %v584
        %v586 = vmul.f32 %v581, %v584
        %v587 = vadd.f32 %v572, %v585
        %v588 = vadd.f32 %v573, %v586
        %589 = vrot.lane.b32.xlu0 %v286, 50
        %v590 = vpop.permute.xlu0 %589
        %591 = vrot.lane.b32.xlu0 %v287, 50
        %v592 = vpop.permute.xlu0 %591
        %593 = vrot.lane.b32.xlu0 %v288, 50
        %v594 = vpop.permute.xlu0 %593
        %vm595 = vcmp.lt.s32.totalorder %v259, 50
        %v596 = vsel %vm595, %v592, %v594
        %v597 = vsel %vm595, %v590, %v592
        %s598 = sld [smem:[#allocation3 + $0x24]]
        %v599 = vstv %s598
        %v600 = vmul.f32 %v597, %v599
        %v601 = vmul.f32 %v596, %v599
        %v602 = vadd.f32 %v587, %v600
        %v603 = vadd.f32 %v588, %v601
        %604 = vrot.lane.b32.xlu0 %v286, 34
        %v605 = vpop.permute.xlu0 %604
        %606 = vrot.lane.b32.xlu0 %v287, 34
        %v607 = vpop.permute.xlu0 %606
        %608 = vrot.lane.b32.xlu0 %v288, 34
        %v609 = vpop.permute.xlu0 %608
        %vm610 = vcmp.lt.s32.totalorder %v259, 34
        %v611 = vsel %vm610, %v607, %v609
        %v612 = vsel %vm610, %v605, %v607
        %s613 = sld [smem:[#allocation3 + $0x2b]]
        %v614 = vstv %s613
        %v615 = vmul.f32 %v612, %v614
        %v616 = vmul.f32 %v611, %v614
        %v617 = vadd.f32 %v602, %v615
        %v618 = vadd.f32 %v603, %v616
        %619 = vrot.lane.b32.xlu0 %v398, 2
        %v620 = vpop.permute.xlu0 %619
        %621 = vrot.lane.b32.xlu0 %v399, 2
        %v622 = vpop.permute.xlu0 %621
        %623 = vrot.lane.b32.xlu0 %v400, 2
        %v624 = vpop.permute.xlu0 %623
        %v625 = vsel %vm520, %v620, %v622
        %v626 = vsel %vm520, %v624, %v620
        %s627 = sld [smem:[#allocation3 + $0x32]]
        %v628 = vstv %s627
        %v629 = vmul.f32 %v626, %v628
        %v630 = vmul.f32 %v625, %v628
        %v631 = vadd.f32 %v617, %v629
        %v632 = vadd.f32 %v618, %v630
        %633 = vrot.lane.b32.xlu0 %v398, 114
        %v634 = vpop.permute.xlu0 %633
        %635 = vrot.lane.b32.xlu0 %v399, 114
        %v636 = vpop.permute.xlu0 %635
        %637 = vrot.lane.b32.xlu0 %v400, 114
        %v638 = vpop.permute.xlu0 %637
        %v639 = vsel %vm535, %v636, %v638
        %v640 = vsel %vm535, %v634, %v636
        %s641 = sld [smem:[#allocation3 + $0x39]]
        %v642 = vstv %s641
        %v643 = vmul.f32 %v640, %v642
        %v644 = vmul.f32 %v639, %v642
        %v645 = vadd.f32 %v631, %v643
        %v646 = vadd.f32 %v632, %v644
        %647 = vrot.lane.b32.xlu0 %v398, 98
        %v648 = vpop.permute.xlu0 %647
        %649 = vrot.lane.b32.xlu0 %v399, 98
        %v650 = vpop.permute.xlu0 %649
        %651 = vrot.lane.b32.xlu0 %v400, 98
        %v652 = vpop.permute.xlu0 %651
        %v653 = vsel %vm550, %v650, %v652
        %v654 = vsel %vm550, %v648, %v650
        %s655 = sld [smem:[#allocation3 + $0x40]]
        %v656 = vstv %s655
        %v657 = vmul.f32 %v654, %v656
        %v658 = vmul.f32 %v653, %v656
        %v659 = vadd.f32 %v645, %v657
        %v660 = vadd.f32 %v646, %v658
        %661 = vrot.lane.b32.xlu0 %v398, 82
        %v662 = vpop.permute.xlu0 %661
        %663 = vrot.lane.b32.xlu0 %v399, 82
        %v664 = vpop.permute.xlu0 %663
        %665 = vrot.lane.b32.xlu0 %v400, 82
        %v666 = vpop.permute.xlu0 %665
        %v667 = vsel %vm565, %v664, %v666
        %v668 = vsel %vm565, %v662, %v664
        %s669 = sld [smem:[#allocation3 + $0x47]]
        %v670 = vstv %s669
        %v671 = vmul.f32 %v668, %v670
        %v672 = vmul.f32 %v667, %v670
        %v673 = vadd.f32 %v659, %v671
        %v674 = vadd.f32 %v660, %v672
        %675 = vrot.lane.b32.xlu0 %v398, 66
        %v676 = vpop.permute.xlu0 %675
        %677 = vrot.lane.b32.xlu0 %v399, 66
        %v678 = vpop.permute.xlu0 %677
        %679 = vrot.lane.b32.xlu0 %v400, 66
        %v680 = vpop.permute.xlu0 %679
        %v681 = vsel %vm580, %v678, %v680
        %v682 = vsel %vm580, %v676, %v678
        %s683 = sld [smem:[#allocation3 + $0x4e]]
        %v684 = vstv %s683
        %v685 = vmul.f32 %v682, %v684
        %v686 = vmul.f32 %v681, %v684
        %v687 = vadd.f32 %v673, %v685
        %v688 = vadd.f32 %v674, %v686
        %689 = vrot.lane.b32.xlu0 %v398, 50
        %v690 = vpop.permute.xlu0 %689
        %691 = vrot.lane.b32.xlu0 %v399, 50
        %v692 = vpop.permute.xlu0 %691
        %693 = vrot.lane.b32.xlu0 %v400, 50
        %v694 = vpop.permute.xlu0 %693
        %v695 = vsel %vm595, %v692, %v694
        %v696 = vsel %vm595, %v690, %v692
        %s697 = sld [smem:[#allocation3 + $0x55]]
        %v698 = vstv %s697
        %v699 = vmul.f32 %v696, %v698
        %v700 = vmul.f32 %v695, %v698
        %v701 = vadd.f32 %v687, %v699
        %v702 = vadd.f32 %v688, %v700
        %703 = vrot.lane.b32.xlu0 %v398, 34
        %v704 = vpop.permute.xlu0 %703
        %705 = vrot.lane.b32.xlu0 %v399, 34
        %v706 = vpop.permute.xlu0 %705
        %707 = vrot.lane.b32.xlu0 %v400, 34
        %v708 = vpop.permute.xlu0 %707
        %v709 = vsel %vm610, %v706, %v708
        %v710 = vsel %vm610, %v704, %v706
        %s711 = sld [smem:[#allocation3 + $0x5c]]
        %v712 = vstv %s711
        %v713 = vmul.f32 %v710, %v712
        %v714 = vmul.f32 %v709, %v712
        %v715 = vadd.f32 %v701, %v713
        %v716 = vadd.f32 %v702, %v714
        %v717 = vadd.s32 %v283, 4294967294
        %v718 = vadd.s32 %v284, 4294967294
        %vm719 = vcmp.ge.s32.totalorder %v717, 0
        %vm720 = vcmp.ge.s32.totalorder %v718, 0
        %vm721 = vcmp.lt.s32.totalorder %v717, 16
        %vm722 = vcmp.lt.s32.totalorder %v718, 16
        %vm723 = vmand %vm719, %vm721
        %vm724 = vmand %vm720, %vm722
        %v725 = vsel %vm723, %v715, 0.0
        %v726 = vsel %vm724, %v716, 0.0
        %v727 = vadd.f32 %v512, %v725
        %v728 = vadd.f32 %v513, %v726
        %729 = vrot.lane.b32.xlu0 %v286, 1
        %v730 = vpop.permute.xlu0 %729
        %731 = vrot.lane.b32.xlu0 %v287, 1
        %v732 = vpop.permute.xlu0 %731
        %733 = vrot.lane.b32.xlu0 %v288, 1
        %v734 = vpop.permute.xlu0 %733
        %vm735 = vcmp.lt.s32.totalorder %v259, 1
        %v736 = vsel %vm735, %v730, %v732
        %v737 = vsel %vm735, %v734, %v730
        %s738 = sld [smem:[#allocation3 + $0x2]]
        %v739 = vstv %s738
        %v740 = vmul.f32 %v737, %v739
        %v741 = vmul.f32 %v736, %v739
        %v742 = vadd.f32 %v740, 0.0
        %v743 = vadd.f32 %v741, 0.0
        %744 = vrot.lane.b32.xlu0 %v286, 113
        %v745 = vpop.permute.xlu0 %744
        %746 = vrot.lane.b32.xlu0 %v287, 113
        %v747 = vpop.permute.xlu0 %746
        %748 = vrot.lane.b32.xlu0 %v288, 113
        %v749 = vpop.permute.xlu0 %748
        %vm750 = vcmp.lt.s32.totalorder %v259, 113
        %v751 = vsel %vm750, %v747, %v749
        %v752 = vsel %vm750, %v745, %v747
        %s753 = sld [smem:[#allocation3 + $0x9]]
        %v754 = vstv %s753
        %v755 = vmul.f32 %v752, %v754
        %v756 = vmul.f32 %v751, %v754
        %v757 = vadd.f32 %v742, %v755
        %v758 = vadd.f32 %v743, %v756
        %759 = vrot.lane.b32.xlu0 %v286, 97
        %v760 = vpop.permute.xlu0 %759
        %761 = vrot.lane.b32.xlu0 %v287, 97
        %v762 = vpop.permute.xlu0 %761
        %763 = vrot.lane.b32.xlu0 %v288, 97
        %v764 = vpop.permute.xlu0 %763
        %vm765 = vcmp.lt.s32.totalorder %v259, 97
        %v766 = vsel %vm765, %v762, %v764
        %v767 = vsel %vm765, %v760, %v762
        %s768 = sld [smem:[#allocation3 + $0x10]]
        %v769 = vstv %s768
        %v770 = vmul.f32 %v767, %v769
        %v771 = vmul.f32 %v766, %v769
        %v772 = vadd.f32 %v757, %v770
        %v773 = vadd.f32 %v758, %v771
        %774 = vrot.lane.b32.xlu0 %v286, 81
        %v775 = vpop.permute.xlu0 %774
        %776 = vrot.lane.b32.xlu0 %v287, 81
        %v777 = vpop.permute.xlu0 %776
        %778 = vrot.lane.b32.xlu0 %v288, 81
        %v779 = vpop.permute.xlu0 %778
        %vm780 = vcmp.lt.s32.totalorder %v259, 81
        %v781 = vsel %vm780, %v777, %v779
        %v782 = vsel %vm780, %v775, %v777
        %s783 = sld [smem:[#allocation3 + $0x17]]
        %v784 = vstv %s783
        %v785 = vmul.f32 %v782, %v784
        %v786 = vmul.f32 %v781, %v784
        %v787 = vadd.f32 %v772, %v785
        %v788 = vadd.f32 %v773, %v786
        %789 = vrot.lane.b32.xlu0 %v286, 65
        %v790 = vpop.permute.xlu0 %789
        %791 = vrot.lane.b32.xlu0 %v287, 65
        %v792 = vpop.permute.xlu0 %791
        %793 = vrot.lane.b32.xlu0 %v288, 65
        %v794 = vpop.permute.xlu0 %793
        %vm795 = vcmp.lt.s32.totalorder %v259, 65
        %v796 = vsel %vm795, %v792, %v794
        %v797 = vsel %vm795, %v790, %v792
        %s798 = sld [smem:[#allocation3 + $0x1e]]
        %v799 = vstv %s798
        %v800 = vmul.f32 %v797, %v799
        %v801 = vmul.f32 %v796, %v799
        %v802 = vadd.f32 %v787, %v800
        %v803 = vadd.f32 %v788, %v801
        %804 = vrot.lane.b32.xlu0 %v286, 49
        %v805 = vpop.permute.xlu0 %804
        %806 = vrot.lane.b32.xlu0 %v287, 49
        %v807 = vpop.permute.xlu0 %806
        %808 = vrot.lane.b32.xlu0 %v288, 49
        %v809 = vpop.permute.xlu0 %808
        %vm810 = vcmp.lt.s32.totalorder %v259, 49
        %v811 = vsel %vm810, %v807, %v809
        %v812 = vsel %vm810, %v805, %v807
        %s813 = sld [smem:[#allocation3 + $0x25]]
        %v814 = vstv %s813
        %v815 = vmul.f32 %v812, %v814
        %v816 = vmul.f32 %v811, %v814
        %v817 = vadd.f32 %v802, %v815
        %v818 = vadd.f32 %v803, %v816
        %819 = vrot.lane.b32.xlu0 %v286, 33
        %v820 = vpop.permute.xlu0 %819
        %821 = vrot.lane.b32.xlu0 %v287, 33
        %v822 = vpop.permute.xlu0 %821
        %823 = vrot.lane.b32.xlu0 %v288, 33
        %v824 = vpop.permute.xlu0 %823
        %vm825 = vcmp.lt.s32.totalorder %v259, 33
        %v826 = vsel %vm825, %v822, %v824
        %v827 = vsel %vm825, %v820, %v822
        %s828 = sld [smem:[#allocation3 + $0x2c]]
        %v829 = vstv %s828
        %v830 = vmul.f32 %v827, %v829
        %v831 = vmul.f32 %v826, %v829
        %v832 = vadd.f32 %v817, %v830
        %v833 = vadd.f32 %v818, %v831
        %834 = vrot.lane.b32.xlu0 %v398, 1
        %v835 = vpop.permute.xlu0 %834
        %836 = vrot.lane.b32.xlu0 %v399, 1
        %v837 = vpop.permute.xlu0 %836
        %838 = vrot.lane.b32.xlu0 %v400, 1
        %v839 = vpop.permute.xlu0 %838
        %v840 = vsel %vm735, %v835, %v837
        %v841 = vsel %vm735, %v839, %v835
        %s842 = sld [smem:[#allocation3 + $0x33]]
        %v843 = vstv %s842
        %v844 = vmul.f32 %v841, %v843
        %v845 = vmul.f32 %v840, %v843
        %v846 = vadd.f32 %v832, %v844
        %v847 = vadd.f32 %v833, %v845
        %848 = vrot.lane.b32.xlu0 %v398, 113
        %v849 = vpop.permute.xlu0 %848
        %850 = vrot.lane.b32.xlu0 %v399, 113
        %v851 = vpop.permute.xlu0 %850
        %852 = vrot.lane.b32.xlu0 %v400, 113
        %v853 = vpop.permute.xlu0 %852
        %v854 = vsel %vm750, %v851, %v853
        %v855 = vsel %vm750, %v849, %v851
        %s856 = sld [smem:[#allocation3 + $0x3a]]
        %v857 = vstv %s856
        %v858 = vmul.f32 %v855, %v857
        %v859 = vmul.f32 %v854, %v857
        %v860 = vadd.f32 %v846, %v858
        %v861 = vadd.f32 %v847, %v859
        %862 = vrot.lane.b32.xlu0 %v398, 97
        %v863 = vpop.permute.xlu0 %862
        %864 = vrot.lane.b32.xlu0 %v399, 97
        %v865 = vpop.permute.xlu0 %864
        %866 = vrot.lane.b32.xlu0 %v400, 97
        %v867 = vpop.permute.xlu0 %866
        %v868 = vsel %vm765, %v865, %v867
        %v869 = vsel %vm765, %v863, %v865
        %s870 = sld [smem:[#allocation3 + $0x41]]
        %v871 = vstv %s870
        %v872 = vmul.f32 %v869, %v871
        %v873 = vmul.f32 %v868, %v871
        %v874 = vadd.f32 %v860, %v872
        %v875 = vadd.f32 %v861, %v873
        %876 = vrot.lane.b32.xlu0 %v398, 81
        %v877 = vpop.permute.xlu0 %876
        %878 = vrot.lane.b32.xlu0 %v399, 81
        %v879 = vpop.permute.xlu0 %878
        %880 = vrot.lane.b32.xlu0 %v400, 81
        %v881 = vpop.permute.xlu0 %880
        %v882 = vsel %vm780, %v879, %v881
        %v883 = vsel %vm780, %v877, %v879
        %s884 = sld [smem:[#allocation3 + $0x48]]
        %v885 = vstv %s884
        %v886 = vmul.f32 %v883, %v885
        %v887 = vmul.f32 %v882, %v885
        %v888 = vadd.f32 %v874, %v886
        %v889 = vadd.f32 %v875, %v887
        %890 = vrot.lane.b32.xlu0 %v398, 65
        %v891 = vpop.permute.xlu0 %890
        %892 = vrot.lane.b32.xlu0 %v399, 65
        %v893 = vpop.permute.xlu0 %892
        %894 = vrot.lane.b32.xlu0 %v400, 65
        %v895 = vpop.permute.xlu0 %894
        %v896 = vsel %vm795, %v893, %v895
        %v897 = vsel %vm795, %v891, %v893
        %s898 = sld [smem:[#allocation3 + $0x4f]]
        %v899 = vstv %s898
        %v900 = vmul.f32 %v897, %v899
        %v901 = vmul.f32 %v896, %v899
        %v902 = vadd.f32 %v888, %v900
        %v903 = vadd.f32 %v889, %v901
        %904 = vrot.lane.b32.xlu0 %v398, 49
        %v905 = vpop.permute.xlu0 %904
        %906 = vrot.lane.b32.xlu0 %v399, 49
        %v907 = vpop.permute.xlu0 %906
        %908 = vrot.lane.b32.xlu0 %v400, 49
        %v909 = vpop.permute.xlu0 %908
        %v910 = vsel %vm810, %v907, %v909
        %v911 = vsel %vm810, %v905, %v907
        %s912 = sld [smem:[#allocation3 + $0x56]]
        %v913 = vstv %s912
        %v914 = vmul.f32 %v911, %v913
        %v915 = vmul.f32 %v910, %v913
        %v916 = vadd.f32 %v902, %v914
        %v917 = vadd.f32 %v903, %v915
        %918 = vrot.lane.b32.xlu0 %v398, 33
        %v919 = vpop.permute.xlu0 %918
        %920 = vrot.lane.b32.xlu0 %v399, 33
        %v921 = vpop.permute.xlu0 %920
        %922 = vrot.lane.b32.xlu0 %v400, 33
        %v923 = vpop.permute.xlu0 %922
        %v924 = vsel %vm825, %v921, %v923
        %v925 = vsel %vm825, %v919, %v921
        %s926 = sld [smem:[#allocation3 + $0x5d]]
        %v927 = vstv %s926
        %v928 = vmul.f32 %v925, %v927
        %v929 = vmul.f32 %v924, %v927
        %v930 = vadd.f32 %v916, %v928
        %v931 = vadd.f32 %v917, %v929
        %v932 = vadd.s32 %v283, 4294967295
        %v933 = vadd.s32 %v284, 4294967295
        %vm934 = vcmp.ge.s32.totalorder %v932, 0
        %vm935 = vcmp.ge.s32.totalorder %v933, 0
        %vm936 = vcmp.lt.s32.totalorder %v932, 16
        %vm937 = vcmp.lt.s32.totalorder %v933, 16
        %vm938 = vmand %vm934, %vm936
        %vm939 = vmand %vm935, %vm937
        %v940 = vsel %vm938, %v930, 0.0
        %v941 = vsel %vm939, %v931, 0.0
        %v942 = vadd.f32 %v727, %v940
        %v943 = vadd.f32 %v728, %v941
        %s944 = sld [smem:[#allocation3 + $0x3]]
        %v945 = vstv %s944
        %v946 = vmul.f32 %v256, %v945
        %v947 = vadd.f32 %v946, 0.0
        %948 = vrot.lane.b32.xlu0 %v286, 112
        %v949 = vpop.permute.xlu0 %948
        %950 = vrot.lane.b32.xlu0 %v287, 112
        %v951 = vpop.permute.xlu0 %950
        %952 = vrot.lane.b32.xlu0 %v288, 112
        %v953 = vpop.permute.xlu0 %952
        %vm954 = vcmp.lt.s32.totalorder %v259, 112
        %v955 = vsel %vm954, %v951, %v953
        %v956 = vsel %vm954, %v949, %v951
        %v957 = vsel %vm954, %v953, %v949
        %s958 = sld [smem:[#allocation3 + $0xa]]
        %v959 = vstv %s958
        %v960 = vmul.f32 %v956, %v959
        %v961 = vmul.f32 %v955, %v959
        %v962 = vmul.f32 %v957, %v959
        %v966 = vrot.slane %v961, 7
        %v967 = vrot.slane %v962, 6
        %v968 = vsel %vm233, %v960, %v966
        %vm969 = vcmask 1041408
        %v970 = vsel %vm969, %v968, %v967
        %v972 = vadd.f32 %v947, %v970
        %973 = vrot.lane.b32.xlu0 %v286, 96
        %v974 = vpop.permute.xlu0 %973
        %975 = vrot.lane.b32.xlu0 %v287, 96
        %v976 = vpop.permute.xlu0 %975
        %977 = vrot.lane.b32.xlu0 %v288, 96
        %v978 = vpop.permute.xlu0 %977
        %vm979 = vcmp.lt.s32.totalorder %v259, 96
        %v980 = vsel %vm979, %v976, %v978
        %v981 = vsel %vm979, %v974, %v976
        %v982 = vsel %vm979, %v978, %v974
        %s983 = sld [smem:[#allocation3 + $0x11]]
        %v984 = vstv %s983
        %v985 = vmul.f32 %v981, %v984
        %v986 = vmul.f32 %v980, %v984
        %v987 = vmul.f32 %v982, %v984
        %v991 = vrot.slane %v986, 7
        %v992 = vrot.slane %v987, 6
        %v993 = vsel %vm233, %v985, %v991
        %v994 = vsel %vm969, %v993, %v992
        %v996 = vadd.f32 %v972, %v994
        %997 = vrot.lane.b32.xlu0 %v286, 80
        %v998 = vpop.permute.xlu0 %997
        %999 = vrot.lane.b32.xlu0 %v287, 80
        %v1000 = vpop.permute.xlu0 %999
        %1001 = vrot.lane.b32.xlu0 %v288, 80
        %v1002 = vpop.permute.xlu0 %1001
        %vm1003 = vcmp.lt.s32.totalorder %v259, 80
        %v1004 = vsel %vm1003, %v1000, %v1002
        %v1005 = vsel %vm1003, %v998, %v1000
        %v1006 = vsel %vm1003, %v1002, %v998
        %s1007 = sld [smem:[#allocation3 + $0x18]]
        %v1008 = vstv %s1007
        %v1009 = vmul.f32 %v1005, %v1008
        %v1010 = vmul.f32 %v1004, %v1008
        %v1011 = vmul.f32 %v1006, %v1008
        %v1015 = vrot.slane %v1010, 7
        %v1016 = vrot.slane %v1011, 6
        %v1017 = vsel %vm233, %v1009, %v1015
        %v1018 = vsel %vm969, %v1017, %v1016
        %v1020 = vadd.f32 %v996, %v1018
        %1021 = vrot.lane.b32.xlu0 %v286, 64
        %v1022 = vpop.permute.xlu0 %1021
        %1023 = vrot.lane.b32.xlu0 %v287, 64
        %v1024 = vpop.permute.xlu0 %1023
        %1025 = vrot.lane.b32.xlu0 %v288, 64
        %v1026 = vpop.permute.xlu0 %1025
        %vm1027 = vcmp.lt.s32.totalorder %v259, 64
        %v1028 = vsel %vm1027, %v1024, %v1026
        %v1029 = vsel %vm1027, %v1022, %v1024
        %v1030 = vsel %vm1027, %v1026, %v1022
        %s1031 = sld [smem:[#allocation3 + $0x1f]]
        %v1032 = vstv %s1031
        %v1033 = vmul.f32 %v1029, %v1032
        %v1034 = vmul.f32 %v1028, %v1032
        %v1035 = vmul.f32 %v1030, %v1032
        %v1039 = vrot.slane %v1034, 7
        %v1040 = vrot.slane %v1035, 6
        %v1041 = vsel %vm233, %v1033, %v1039
        %v1042 = vsel %vm969, %v1041, %v1040
        %v1044 = vadd.f32 %v1020, %v1042
        %1045 = vrot.lane.b32.xlu0 %v286, 48
        %v1046 = vpop.permute.xlu0 %1045
        %1047 = vrot.lane.b32.xlu0 %v287, 48
        %v1048 = vpop.permute.xlu0 %1047
        %1049 = vrot.lane.b32.xlu0 %v288, 48
        %v1050 = vpop.permute.xlu0 %1049
        %vm1051 = vcmp.lt.s32.totalorder %v259, 48
        %v1052 = vsel %vm1051, %v1048, %v1050
        %v1053 = vsel %vm1051, %v1046, %v1048
        %v1054 = vsel %vm1051, %v1050, %v1046
        %s1055 = sld [smem:[#allocation3 + $0x26]]
        %v1056 = vstv %s1055
        %v1057 = vmul.f32 %v1053, %v1056
        %v1058 = vmul.f32 %v1052, %v1056
        %v1059 = vmul.f32 %v1054, %v1056
        %v1063 = vrot.slane %v1058, 7
        %v1064 = vrot.slane %v1059, 6
        %v1065 = vsel %vm233, %v1057, %v1063
        %v1066 = vsel %vm969, %v1065, %v1064
        %v1068 = vadd.f32 %v1044, %v1066
        %1069 = vrot.lane.b32.xlu0 %v286, 32
        %v1070 = vpop.permute.xlu0 %1069
        %1071 = vrot.lane.b32.xlu0 %v287, 32
        %v1072 = vpop.permute.xlu0 %1071
        %1073 = vrot.lane.b32.xlu0 %v288, 32
        %v1074 = vpop.permute.xlu0 %1073
        %vm1075 = vcmp.lt.s32.totalorder %v259, 32
        %v1076 = vsel %vm1075, %v1072, %v1074
        %v1077 = vsel %vm1075, %v1070, %v1072
        %v1078 = vsel %vm1075, %v1074, %v1070
        %s1079 = sld [smem:[#allocation3 + $0x2d]]
        %v1080 = vstv %s1079
        %v1081 = vmul.f32 %v1077, %v1080
        %v1082 = vmul.f32 %v1076, %v1080
        %v1083 = vmul.f32 %v1078, %v1080
        %v1087 = vrot.slane %v1082, 7
        %v1088 = vrot.slane %v1083, 6
        %v1089 = vsel %vm233, %v1081, %v1087
        %v1090 = vsel %vm969, %v1089, %v1088
        %v1092 = vadd.f32 %v1068, %v1090
        %s1093 = sld [smem:[#allocation3 + $0x34]]
        %v1094 = vstv %s1093
        %v1095 = vmul.f32 %v257, %v1094
        %v1096 = vadd.f32 %v1092, %v1095
        %1097 = vrot.lane.b32.xlu0 %v398, 112
        %v1098 = vpop.permute.xlu0 %1097
        %1099 = vrot.lane.b32.xlu0 %v399, 112
        %v1100 = vpop.permute.xlu0 %1099
        %1101 = vrot.lane.b32.xlu0 %v400, 112
        %v1102 = vpop.permute.xlu0 %1101
        %v1103 = vsel %vm954, %v1100, %v1102
        %v1104 = vsel %vm954, %v1098, %v1100
        %v1105 = vsel %vm954, %v1102, %v1098
        %s1106 = sld [smem:[#allocation3 + $0x3b]]
        %v1107 = vstv %s1106
        %v1108 = vmul.f32 %v1104, %v1107
        %v1109 = vmul.f32 %v1103, %v1107
        %v1110 = vmul.f32 %v1105, %v1107
        %v1114 = vrot.slane %v1109, 7
        %v1115 = vrot.slane %v1110, 6
        %v1116 = vsel %vm233, %v1108, %v1114
        %v1117 = vsel %vm969, %v1116, %v1115
        %v1119 = vadd.f32 %v1096, %v1117
        %1120 = vrot.lane.b32.xlu0 %v398, 96
        %v1121 = vpop.permute.xlu0 %1120
        %1122 = vrot.lane.b32.xlu0 %v399, 96
        %v1123 = vpop.permute.xlu0 %1122
        %1124 = vrot.lane.b32.xlu0 %v400, 96
        %v1125 = vpop.permute.xlu0 %1124
        %v1126 = vsel %vm979, %v1123, %v1125
        %v1127 = vsel %vm979, %v1121, %v1123
        %v1128 = vsel %vm979, %v1125, %v1121
        %s1129 = sld [smem:[#allocation3 + $0x42]]
        %v1130 = vstv %s1129
        %v1131 = vmul.f32 %v1127, %v1130
        %v1132 = vmul.f32 %v1126, %v1130
        %v1133 = vmul.f32 %v1128, %v1130
        %v1137 = vrot.slane %v1132, 7
        %v1138 = vrot.slane %v1133, 6
        %v1139 = vsel %vm233, %v1131, %v1137
        %v1140 = vsel %vm969, %v1139, %v1138
        %v1142 = vadd.f32 %v1119, %v1140
        %1143 = vrot.lane.b32.xlu0 %v398, 80
        %v1144 = vpop.permute.xlu0 %1143
        %1145 = vrot.lane.b32.xlu0 %v399, 80
        %v1146 = vpop.permute.xlu0 %1145
        %1147 = vrot.lane.b32.xlu0 %v400, 80
        %v1148 = vpop.permute.xlu0 %1147
        %v1149 = vsel %vm1003, %v1146, %v1148
        %v1150 = vsel %vm1003, %v1144, %v1146
        %v1151 = vsel %vm1003, %v1148, %v1144
        %s1152 = sld [smem:[#allocation3 + $0x49]]
        %v1153 = vstv %s1152
        %v1154 = vmul.f32 %v1150, %v1153
        %v1155 = vmul.f32 %v1149, %v1153
        %v1156 = vmul.f32 %v1151, %v1153
        %v1160 = vrot.slane %v1155, 7
        %v1161 = vrot.slane %v1156, 6
        %v1162 = vsel %vm233, %v1154, %v1160
        %v1163 = vsel %vm969, %v1162, %v1161
        %v1165 = vadd.f32 %v1142, %v1163
        %1166 = vrot.lane.b32.xlu0 %v398, 64
        %v1167 = vpop.permute.xlu0 %1166
        %1168 = vrot.lane.b32.xlu0 %v399, 64
        %v1169 = vpop.permute.xlu0 %1168
        %1170 = vrot.lane.b32.xlu0 %v400, 64
        %v1171 = vpop.permute.xlu0 %1170
        %v1172 = vsel %vm1027, %v1169, %v1171
        %v1173 = vsel %vm1027, %v1167, %v1169
        %v1174 = vsel %vm1027, %v1171, %v1167
        %s1175 = sld [smem:[#allocation3 + $0x50]]
        %v1176 = vstv %s1175
        %v1177 = vmul.f32 %v1173, %v1176
        %v1178 = vmul.f32 %v1172, %v1176
        %v1179 = vmul.f32 %v1174, %v1176
        %v1183 = vrot.slane %v1178, 7
        %v1184 = vrot.slane %v1179, 6
        %v1185 = vsel %vm233, %v1177, %v1183
        %v1186 = vsel %vm969, %v1185, %v1184
        %v1188 = vadd.f32 %v1165, %v1186
        %1189 = vrot.lane.b32.xlu0 %v398, 48
        %v1190 = vpop.permute.xlu0 %1189
        %1191 = vrot.lane.b32.xlu0 %v399, 48
        %v1192 = vpop.permute.xlu0 %1191
        %1193 = vrot.lane.b32.xlu0 %v400, 48
        %v1194 = vpop.permute.xlu0 %1193
        %v1195 = vsel %vm1051, %v1192, %v1194
        %v1196 = vsel %vm1051, %v1190, %v1192
        %v1197 = vsel %vm1051, %v1194, %v1190
        %s1198 = sld [smem:[#allocation3 + $0x57]]
        %v1199 = vstv %s1198
        %v1200 = vmul.f32 %v1196, %v1199
        %v1201 = vmul.f32 %v1195, %v1199
        %v1202 = vmul.f32 %v1197, %v1199
        %v1206 = vrot.slane %v1201, 7
        %v1207 = vrot.slane %v1202, 6
        %v1208 = vsel %vm233, %v1200, %v1206
        %v1209 = vsel %vm969, %v1208, %v1207
        %v1211 = vadd.f32 %v1188, %v1209
        %1212 = vrot.lane.b32.xlu0 %v398, 32
        %v1213 = vpop.permute.xlu0 %1212
        %1214 = vrot.lane.b32.xlu0 %v399, 32
        %v1215 = vpop.permute.xlu0 %1214
        %1216 = vrot.lane.b32.xlu0 %v400, 32
        %v1217 = vpop.permute.xlu0 %1216
        %v1218 = vsel %vm1075, %v1215, %v1217
        %v1219 = vsel %vm1075, %v1213, %v1215
        %v1220 = vsel %vm1075, %v1217, %v1213
        %s1221 = sld [smem:[#allocation3 + $0x5e]]
        %v1222 = vstv %s1221
        %v1223 = vmul.f32 %v1219, %v1222
        %v1224 = vmul.f32 %v1218, %v1222
        %v1225 = vmul.f32 %v1220, %v1222
        %v1229 = vrot.slane %v1224, 7
        %v1230 = vrot.slane %v1225, 6
        %v1231 = vsel %vm233, %v1223, %v1229
        %v1232 = vsel %vm969, %v1231, %v1230
        %v1234 = vadd.f32 %v1211, %v1232
        %vm1235 = vcmp.ge.s32.totalorder %v283, 0
        %vm1236 = vcmp.ge.s32.totalorder %v284, 0
        %vm1237 = vcmp.lt.s32.totalorder %v283, 16
        %vm1238 = vcmp.lt.s32.totalorder %v284, 16
        %vm1239 = vmand %vm1235, %vm1237
        %vm1240 = vmand %vm1236, %vm1238
        %v1242 = vperm.slane %v1234, 0
        %v1243 = vperm.slane %v1234, 1
        %v1246 = vsel %vm1239, %v1242, 0.0
        %v1247 = vsel %vm1240, %v1243, 0.0
        %v1248 = vadd.f32 %v942, %v1246
        %v1249 = vadd.f32 %v943, %v1247
        %1250 = vrot.lane.b32.xlu0 %v286, 127
        %v1251 = vpop.permute.xlu0 %1250
        %1252 = vrot.lane.b32.xlu0 %v287, 127
        %v1253 = vpop.permute.xlu0 %1252
        %1254 = vrot.lane.b32.xlu0 %v288, 127
        %v1255 = vpop.permute.xlu0 %1254
        %vm1256 = vcmp.lt.s32.totalorder %v259, 127
        %v1257 = vsel %vm1256, %v1253, %v1255
        %v1258 = vsel %vm1256, %v1251, %v1253
        %s1259 = sld [smem:[#allocation3 + $0x4]]
        %v1260 = vstv %s1259
        %v1261 = vmul.f32 %v1258, %v1260
        %v1262 = vmul.f32 %v1257, %v1260
        %v1263 = vadd.f32 %v1261, 0.0
        %v1264 = vadd.f32 %v1262, 0.0
        %1265 = vrot.lane.b32.xlu0 %v286, 111
        %v1266 = vpop.permute.xlu0 %1265
        %1267 = vrot.lane.b32.xlu0 %v287, 111
        %v1268 = vpop.permute.xlu0 %1267
        %1269 = vrot.lane.b32.xlu0 %v288, 111
        %v1270 = vpop.permute.xlu0 %1269
        %vm1271 = vcmp.lt.s32.totalorder %v259, 111
        %v1272 = vsel %vm1271, %v1268, %v1270
        %v1273 = vsel %vm1271, %v1266, %v1268
        %s1274 = sld [smem:[#allocation3 + $0xb]]
        %v1275 = vstv %s1274
        %v1276 = vmul.f32 %v1273, %v1275
        %v1277 = vmul.f32 %v1272, %v1275
        %v1278 = vadd.f32 %v1263, %v1276
        %v1279 = vadd.f32 %v1264, %v1277
        %1280 = vrot.lane.b32.xlu0 %v286, 95
        %v1281 = vpop.permute.xlu0 %1280
        %1282 = vrot.lane.b32.xlu0 %v287, 95
        %v1283 = vpop.permute.xlu0 %1282
        %1284 = vrot.lane.b32.xlu0 %v288, 95
        %v1285 = vpop.permute.xlu0 %1284
        %vm1286 = vcmp.lt.s32.totalorder %v259, 95
        %v1287 = vsel %vm1286, %v1283, %v1285
        %v1288 = vsel %vm1286, %v1281, %v1283
        %s1289 = sld [smem:[#allocation3 + $0x12]]
        %v1290 = vstv %s1289
        %v1291 = vmul.f32 %v1288, %v1290
        %v1292 = vmul.f32 %v1287, %v1290
        %v1293 = vadd.f32 %v1278, %v1291
        %v1294 = vadd.f32 %v1279, %v1292
        %1295 = vrot.lane.b32.xlu0 %v286, 79
        %v1296 = vpop.permute.xlu0 %1295
        %1297 = vrot.lane.b32.xlu0 %v287, 79
        %v1298 = vpop.permute.xlu0 %1297
        %1299 = vrot.lane.b32.xlu0 %v288, 79
        %v1300 = vpop.permute.xlu0 %1299
        %vm1301 = vcmp.lt.s32.totalorder %v259, 79
        %v1302 = vsel %vm1301, %v1298, %v1300
        %v1303 = vsel %vm1301, %v1296, %v1298
        %s1304 = sld [smem:[#allocation3 + $0x19]]
        %v1305 = vstv %s1304
        %v1306 = vmul.f32 %v1303, %v1305
        %v1307 = vmul.f32 %v1302, %v1305
        %v1308 = vadd.f32 %v1293, %v1306
        %v1309 = vadd.f32 %v1294, %v1307
        %1310 = vrot.lane.b32.xlu0 %v286, 63
        %v1311 = vpop.permute.xlu0 %1310
        %1312 = vrot.lane.b32.xlu0 %v287, 63
        %v1313 = vpop.permute.xlu0 %1312
        %1314 = vrot.lane.b32.xlu0 %v288, 63
        %v1315 = vpop.permute.xlu0 %1314
        %vm1316 = vcmp.lt.s32.totalorder %v259, 63
        %v1317 = vsel %vm1316, %v1313, %v1315
        %v1318 = vsel %vm1316, %v1311, %v1313
        %s1319 = sld [smem:[#allocation3 + $0x20]]
        %v1320 = vstv %s1319
        %v1321 = vmul.f32 %v1318, %v1320
        %v1322 = vmul.f32 %v1317, %v1320
        %v1323 = vadd.f32 %v1308, %v1321
        %v1324 = vadd.f32 %v1309, %v1322
        %1325 = vrot.lane.b32.xlu0 %v286, 47
        %v1326 = vpop.permute.xlu0 %1325
        %1327 = vrot.lane.b32.xlu0 %v287, 47
        %v1328 = vpop.permute.xlu0 %1327
        %1329 = vrot.lane.b32.xlu0 %v288, 47
        %v1330 = vpop.permute.xlu0 %1329
        %vm1331 = vcmp.lt.s32.totalorder %v259, 47
        %v1332 = vsel %vm1331, %v1328, %v1330
        %v1333 = vsel %vm1331, %v1326, %v1328
        %s1334 = sld [smem:[#allocation3 + $0x27]]
        %v1335 = vstv %s1334
        %v1336 = vmul.f32 %v1333, %v1335
        %v1337 = vmul.f32 %v1332, %v1335
        %v1338 = vadd.f32 %v1323, %v1336
        %v1339 = vadd.f32 %v1324, %v1337
        %1340 = vrot.lane.b32.xlu0 %v286, 31
        %v1341 = vpop.permute.xlu0 %1340
        %1342 = vrot.lane.b32.xlu0 %v287, 31
        %v1343 = vpop.permute.xlu0 %1342
        %1344 = vrot.lane.b32.xlu0 %v288, 31
        %v1345 = vpop.permute.xlu0 %1344
        %vm1346 = vcmp.lt.s32.totalorder %v259, 31
        %v1347 = vsel %vm1346, %v1343, %v1345
        %v1348 = vsel %vm1346, %v1341, %v1343
        %s1349 = sld [smem:[#allocation3 + $0x2e]]
        %v1350 = vstv %s1349
        %v1351 = vmul.f32 %v1348, %v1350
        %v1352 = vmul.f32 %v1347, %v1350
        %v1353 = vadd.f32 %v1338, %v1351
        %v1354 = vadd.f32 %v1339, %v1352
        %1355 = vrot.lane.b32.xlu0 %v398, 127
        %v1356 = vpop.permute.xlu0 %1355
        %1357 = vrot.lane.b32.xlu0 %v399, 127
        %v1358 = vpop.permute.xlu0 %1357
        %1359 = vrot.lane.b32.xlu0 %v400, 127
        %v1360 = vpop.permute.xlu0 %1359
        %v1361 = vsel %vm1256, %v1358, %v1360
        %v1362 = vsel %vm1256, %v1356, %v1358
        %s1363 = sld [smem:[#allocation3 + $0x35]]
        %v1364 = vstv %s1363
        %v1365 = vmul.f32 %v1362, %v1364
        %v1366 = vmul.f32 %v1361, %v1364
        %v1367 = vadd.f32 %v1353, %v1365
        %v1368 = vadd.f32 %v1354, %v1366
        %1369 = vrot.lane.b32.xlu0 %v398, 111
        %v1370 = vpop.permute.xlu0 %1369
        %1371 = vrot.lane.b32.xlu0 %v399, 111
        %v1372 = vpop.permute.xlu0 %1371
        %1373 = vrot.lane.b32.xlu0 %v400, 111
        %v1374 = vpop.permute.xlu0 %1373
        %v1375 = vsel %vm1271, %v1372, %v1374
        %v1376 = vsel %vm1271, %v1370, %v1372
        %s1377 = sld [smem:[#allocation3 + $0x3c]]
        %v1378 = vstv %s1377
        %v1379 = vmul.f32 %v1376, %v1378
        %v1380 = vmul.f32 %v1375, %v1378
        %v1381 = vadd.f32 %v1367, %v1379
        %v1382 = vadd.f32 %v1368, %v1380
        %1383 = vrot.lane.b32.xlu0 %v398, 95
        %v1384 = vpop.permute.xlu0 %1383
        %1385 = vrot.lane.b32.xlu0 %v399, 95
        %v1386 = vpop.permute.xlu0 %1385
        %1387 = vrot.lane.b32.xlu0 %v400, 95
        %v1388 = vpop.permute.xlu0 %1387
        %v1389 = vsel %vm1286, %v1386, %v1388
        %v1390 = vsel %vm1286, %v1384, %v1386
        %s1391 = sld [smem:[#allocation3 + $0x43]]
        %v1392 = vstv %s1391
        %v1393 = vmul.f32 %v1390, %v1392
        %v1394 = vmul.f32 %v1389, %v1392
        %v1395 = vadd.f32 %v1381, %v1393
        %v1396 = vadd.f32 %v1382, %v1394
        %1397 = vrot.lane.b32.xlu0 %v398, 79
        %v1398 = vpop.permute.xlu0 %1397
        %1399 = vrot.lane.b32.xlu0 %v399, 79
        %v1400 = vpop.permute.xlu0 %1399
        %1401 = vrot.lane.b32.xlu0 %v400, 79
        %v1402 = vpop.permute.xlu0 %1401
        %v1403 = vsel %vm1301, %v1400, %v1402
        %v1404 = vsel %vm1301, %v1398, %v1400
        %s1405 = sld [smem:[#allocation3 + $0x4a]]
        %v1406 = vstv %s1405
        %v1407 = vmul.f32 %v1404, %v1406
        %v1408 = vmul.f32 %v1403, %v1406
        %v1409 = vadd.f32 %v1395, %v1407
        %v1410 = vadd.f32 %v1396, %v1408
        %1411 = vrot.lane.b32.xlu0 %v398, 63
        %v1412 = vpop.permute.xlu0 %1411
        %1413 = vrot.lane.b32.xlu0 %v399, 63
        %v1414 = vpop.permute.xlu0 %1413
        %1415 = vrot.lane.b32.xlu0 %v400, 63
        %v1416 = vpop.permute.xlu0 %1415
        %v1417 = vsel %vm1316, %v1414, %v1416
        %v1418 = vsel %vm1316, %v1412, %v1414
        %s1419 = sld [smem:[#allocation3 + $0x51]]
        %v1420 = vstv %s1419
        %v1421 = vmul.f32 %v1418, %v1420
        %v1422 = vmul.f32 %v1417, %v1420
        %v1423 = vadd.f32 %v1409, %v1421
        %v1424 = vadd.f32 %v1410, %v1422
        %1425 = vrot.lane.b32.xlu0 %v398, 47
        %v1426 = vpop.permute.xlu0 %1425
        %1427 = vrot.lane.b32.xlu0 %v399, 47
        %v1428 = vpop.permute.xlu0 %1427
        %1429 = vrot.lane.b32.xlu0 %v400, 47
        %v1430 = vpop.permute.xlu0 %1429
        %v1431 = vsel %vm1331, %v1428, %v1430
        %v1432 = vsel %vm1331, %v1426, %v1428
        %s1433 = sld [smem:[#allocation3 + $0x58]]
        %v1434 = vstv %s1433
        %v1435 = vmul.f32 %v1432, %v1434
        %v1436 = vmul.f32 %v1431, %v1434
        %v1437 = vadd.f32 %v1423, %v1435
        %v1438 = vadd.f32 %v1424, %v1436
        %1439 = vrot.lane.b32.xlu0 %v398, 31
        %v1440 = vpop.permute.xlu0 %1439
        %1441 = vrot.lane.b32.xlu0 %v399, 31
        %v1442 = vpop.permute.xlu0 %1441
        %1443 = vrot.lane.b32.xlu0 %v400, 31
        %v1444 = vpop.permute.xlu0 %1443
        %v1445 = vsel %vm1346, %v1442, %v1444
        %v1446 = vsel %vm1346, %v1440, %v1442
        %s1447 = sld [smem:[#allocation3 + $0x5f]]
        %v1448 = vstv %s1447
        %v1449 = vmul.f32 %v1446, %v1448
        %v1450 = vmul.f32 %v1445, %v1448
        %v1451 = vadd.f32 %v1437, %v1449
        %v1452 = vadd.f32 %v1438, %v1450
        %v1453 = vadd.s32 %v283, 1
        %v1454 = vadd.s32 %v284, 1
        %vm1455 = vcmp.ge.s32.totalorder %v1453, 0
        %vm1456 = vcmp.ge.s32.totalorder %v1454, 0
        %vm1457 = vcmp.lt.s32.totalorder %v1453, 16
        %vm1458 = vcmp.lt.s32.totalorder %v1454, 16
        %vm1459 = vmand %vm1455, %vm1457
        %vm1460 = vmand %vm1456, %vm1458
        %v1461 = vsel %vm1459, %v1451, 0.0
        %v1462 = vsel %vm1460, %v1452, 0.0
        %v1463 = vadd.f32 %v1248, %v1461
        %v1464 = vadd.f32 %v1249, %v1462
        %1465 = vrot.lane.b32.xlu0 %v286, 126
        %v1466 = vpop.permute.xlu0 %1465
        %1467 = vrot.lane.b32.xlu0 %v287, 126
        %v1468 = vpop.permute.xlu0 %1467
        %1469 = vrot.lane.b32.xlu0 %v288, 126
        %v1470 = vpop.permute.xlu0 %1469
        %vm1471 = vcmp.lt.s32.totalorder %v259, 126
        %v1472 = vsel %vm1471, %v1468, %v1470
        %v1473 = vsel %vm1471, %v1466, %v1468
        %s1474 = sld [smem:[#allocation3 + $0x5]]
        %v1475 = vstv %s1474
        %v1476 = vmul.f32 %v1473, %v1475
        %v1477 = vmul.f32 %v1472, %v1475
        %v1478 = vadd.f32 %v1476, 0.0
        %v1479 = vadd.f32 %v1477, 0.0
        %1480 = vrot.lane.b32.xlu0 %v286, 110
        %v1481 = vpop.permute.xlu0 %1480
        %1482 = vrot.lane.b32.xlu0 %v287, 110
        %v1483 = vpop.permute.xlu0 %1482
        %1484 = vrot.lane.b32.xlu0 %v288, 110
        %v1485 = vpop.permute.xlu0 %1484
        %vm1486 = vcmp.lt.s32.totalorder %v259, 110
        %v1487 = vsel %vm1486, %v1483, %v1485
        %v1488 = vsel %vm1486, %v1481, %v1483
        %s1489 = sld [smem:[#allocation3 + $0xc]]
        %v1490 = vstv %s1489
        %v1491 = vmul.f32 %v1488, %v1490
        %v1492 = vmul.f32 %v1487, %v1490
        %v1493 = vadd.f32 %v1478, %v1491
        %v1494 = vadd.f32 %v1479, %v1492
        %1495 = vrot.lane.b32.xlu0 %v286, 94
        %v1496 = vpop.permute.xlu0 %1495
        %1497 = vrot.lane.b32.xlu0 %v287, 94
        %v1498 = vpop.permute.xlu0 %1497
        %1499 = vrot.lane.b32.xlu0 %v288, 94
        %v1500 = vpop.permute.xlu0 %1499
        %vm1501 = vcmp.lt.s32.totalorder %v259, 94
        %v1502 = vsel %vm1501, %v1498, %v1500
        %v1503 = vsel %vm1501, %v1496, %v1498
        %s1504 = sld [smem:[#allocation3 + $0x13]]
        %v1505 = vstv %s1504
        %v1506 = vmul.f32 %v1503, %v1505
        %v1507 = vmul.f32 %v1502, %v1505
        %v1508 = vadd.f32 %v1493, %v1506
        %v1509 = vadd.f32 %v1494, %v1507
        %1510 = vrot.lane.b32.xlu0 %v286, 78
        %v1511 = vpop.permute.xlu0 %1510
        %1512 = vrot.lane.b32.xlu0 %v287, 78
        %v1513 = vpop.permute.xlu0 %1512
        %1514 = vrot.lane.b32.xlu0 %v288, 78
        %v1515 = vpop.permute.xlu0 %1514
        %vm1516 = vcmp.lt.s32.totalorder %v259, 78
        %v1517 = vsel %vm1516, %v1513, %v1515
        %v1518 = vsel %vm1516, %v1511, %v1513
        %s1519 = sld [smem:[#allocation3 + $0x1a]]
        %v1520 = vstv %s1519
        %v1521 = vmul.f32 %v1518, %v1520
        %v1522 = vmul.f32 %v1517, %v1520
        %v1523 = vadd.f32 %v1508, %v1521
        %v1524 = vadd.f32 %v1509, %v1522
        %1525 = vrot.lane.b32.xlu0 %v286, 62
        %v1526 = vpop.permute.xlu0 %1525
        %1527 = vrot.lane.b32.xlu0 %v287, 62
        %v1528 = vpop.permute.xlu0 %1527
        %1529 = vrot.lane.b32.xlu0 %v288, 62
        %v1530 = vpop.permute.xlu0 %1529
        %vm1531 = vcmp.lt.s32.totalorder %v259, 62
        %v1532 = vsel %vm1531, %v1528, %v1530
        %v1533 = vsel %vm1531, %v1526, %v1528
        %s1534 = sld [smem:[#allocation3 + $0x21]]
        %v1535 = vstv %s1534
        %v1536 = vmul.f32 %v1533, %v1535
        %v1537 = vmul.f32 %v1532, %v1535
        %v1538 = vadd.f32 %v1523, %v1536
        %v1539 = vadd.f32 %v1524, %v1537
        %1540 = vrot.lane.b32.xlu0 %v286, 46
        %v1541 = vpop.permute.xlu0 %1540
        %1542 = vrot.lane.b32.xlu0 %v287, 46
        %v1543 = vpop.permute.xlu0 %1542
        %1544 = vrot.lane.b32.xlu0 %v288, 46
        %v1545 = vpop.permute.xlu0 %1544
        %vm1546 = vcmp.lt.s32.totalorder %v259, 46
        %v1547 = vsel %vm1546, %v1543, %v1545
        %v1548 = vsel %vm1546, %v1541, %v1543
        %s1549 = sld [smem:[#allocation3 + $0x28]]
        %v1550 = vstv %s1549
        %v1551 = vmul.f32 %v1548, %v1550
        %v1552 = vmul.f32 %v1547, %v1550
        %v1553 = vadd.f32 %v1538, %v1551
        %v1554 = vadd.f32 %v1539, %v1552
        %1555 = vrot.lane.b32.xlu0 %v286, 30
        %v1556 = vpop.permute.xlu0 %1555
        %1557 = vrot.lane.b32.xlu0 %v287, 30
        %v1558 = vpop.permute.xlu0 %1557
        %1559 = vrot.lane.b32.xlu0 %v288, 30
        %v1560 = vpop.permute.xlu0 %1559
        %vm1561 = vcmp.lt.s32.totalorder %v259, 30
        %v1562 = vsel %vm1561, %v1558, %v1560
        %v1563 = vsel %vm1561, %v1556, %v1558
        %s1564 = sld [smem:[#allocation3 + $0x2f]]
        %v1565 = vstv %s1564
        %v1566 = vmul.f32 %v1563, %v1565
        %v1567 = vmul.f32 %v1562, %v1565
        %v1568 = vadd.f32 %v1553, %v1566
        %v1569 = vadd.f32 %v1554, %v1567
        %1570 = vrot.lane.b32.xlu0 %v398, 126
        %v1571 = vpop.permute.xlu0 %1570
        %1572 = vrot.lane.b32.xlu0 %v399, 126
        %v1573 = vpop.permute.xlu0 %1572
        %1574 = vrot.lane.b32.xlu0 %v400, 126
        %v1575 = vpop.permute.xlu0 %1574
        %v1576 = vsel %vm1471, %v1573, %v1575
        %v1577 = vsel %vm1471, %v1571, %v1573
        %s1578 = sld [smem:[#allocation3 + $0x36]]
        %v1579 = vstv %s1578
        %v1580 = vmul.f32 %v1577, %v1579
        %v1581 = vmul.f32 %v1576, %v1579
        %v1582 = vadd.f32 %v1568, %v1580
        %v1583 = vadd.f32 %v1569, %v1581
        %1584 = vrot.lane.b32.xlu0 %v398, 110
        %v1585 = vpop.permute.xlu0 %1584
        %1586 = vrot.lane.b32.xlu0 %v399, 110
        %v1587 = vpop.permute.xlu0 %1586
        %1588 = vrot.lane.b32.xlu0 %v400, 110
        %v1589 = vpop.permute.xlu0 %1588
        %v1590 = vsel %vm1486, %v1587, %v1589
        %v1591 = vsel %vm1486, %v1585, %v1587
        %s1592 = sld [smem:[#allocation3 + $0x3d]]
        %v1593 = vstv %s1592
        %v1594 = vmul.f32 %v1591, %v1593
        %v1595 = vmul.f32 %v1590, %v1593
        %v1596 = vadd.f32 %v1582, %v1594
        %v1597 = vadd.f32 %v1583, %v1595
        %1598 = vrot.lane.b32.xlu0 %v398, 94
        %v1599 = vpop.permute.xlu0 %1598
        %1600 = vrot.lane.b32.xlu0 %v399, 94
        %v1601 = vpop.permute.xlu0 %1600
        %1602 = vrot.lane.b32.xlu0 %v400, 94
        %v1603 = vpop.permute.xlu0 %1602
        %v1604 = vsel %vm1501, %v1601, %v1603
        %v1605 = vsel %vm1501, %v1599, %v1601
        %s1606 = sld [smem:[#allocation3 + $0x44]]
        %v1607 = vstv %s1606
        %v1608 = vmul.f32 %v1605, %v1607
        %v1609 = vmul.f32 %v1604, %v1607
        %v1610 = vadd.f32 %v1596, %v1608
        %v1611 = vadd.f32 %v1597, %v1609
        %1612 = vrot.lane.b32.xlu0 %v398, 78
        %v1613 = vpop.permute.xlu0 %1612
        %1614 = vrot.lane.b32.xlu0 %v399, 78
        %v1615 = vpop.permute.xlu0 %1614
        %1616 = vrot.lane.b32.xlu0 %v400, 78
        %v1617 = vpop.permute.xlu0 %1616
        %v1618 = vsel %vm1516, %v1615, %v1617
        %v1619 = vsel %vm1516, %v1613, %v1615
        %s1620 = sld [smem:[#allocation3 + $0x4b]]
        %v1621 = vstv %s1620
        %v1622 = vmul.f32 %v1619, %v1621
        %v1623 = vmul.f32 %v1618, %v1621
        %v1624 = vadd.f32 %v1610, %v1622
        %v1625 = vadd.f32 %v1611, %v1623
        %1626 = vrot.lane.b32.xlu0 %v398, 62
        %v1627 = vpop.permute.xlu0 %1626
        %1628 = vrot.lane.b32.xlu0 %v399, 62
        %v1629 = vpop.permute.xlu0 %1628
        %1630 = vrot.lane.b32.xlu0 %v400, 62
        %v1631 = vpop.permute.xlu0 %1630
        %v1632 = vsel %vm1531, %v1629, %v1631
        %v1633 = vsel %vm1531, %v1627, %v1629
        %s1634 = sld [smem:[#allocation3 + $0x52]]
        %v1635 = vstv %s1634
        %v1636 = vmul.f32 %v1633, %v1635
        %v1637 = vmul.f32 %v1632, %v1635
        %v1638 = vadd.f32 %v1624, %v1636
        %v1639 = vadd.f32 %v1625, %v1637
        %1640 = vrot.lane.b32.xlu0 %v398, 46
        %v1641 = vpop.permute.xlu0 %1640
        %1642 = vrot.lane.b32.xlu0 %v399, 46
        %v1643 = vpop.permute.xlu0 %1642
        %1644 = vrot.lane.b32.xlu0 %v400, 46
        %v1645 = vpop.permute.xlu0 %1644
        %v1646 = vsel %vm1546, %v1643, %v1645
        %v1647 = vsel %vm1546, %v1641, %v1643
        %s1648 = sld [smem:[#allocation3 + $0x59]]
        %v1649 = vstv %s1648
        %v1650 = vmul.f32 %v1647, %v1649
        %v1651 = vmul.f32 %v1646, %v1649
        %v1652 = vadd.f32 %v1638, %v1650
        %v1653 = vadd.f32 %v1639, %v1651
        %1654 = vrot.lane.b32.xlu0 %v398, 30
        %v1655 = vpop.permute.xlu0 %1654
        %1656 = vrot.lane.b32.xlu0 %v399, 30
        %v1657 = vpop.permute.xlu0 %1656
        %1658 = vrot.lane.b32.xlu0 %v400, 30
        %v1659 = vpop.permute.xlu0 %1658
        %v1660 = vsel %vm1561, %v1657, %v1659
        %v1661 = vsel %vm1561, %v1655, %v1657
        %s1662 = sld [smem:[#allocation3 + $0x60]]
        %v1663 = vstv %s1662
        %v1664 = vmul.f32 %v1661, %v1663
        %v1665 = vmul.f32 %v1660, %v1663
        %v1666 = vadd.f32 %v1652, %v1664
        %v1667 = vadd.f32 %v1653, %v1665
        %v1668 = vadd.s32 %v283, 2
        %v1669 = vadd.s32 %v284, 2
        %vm1670 = vcmp.ge.s32.totalorder %v1668, 0
        %vm1671 = vcmp.ge.s32.totalorder %v1669, 0
        %vm1672 = vcmp.lt.s32.totalorder %v1668, 16
        %vm1673 = vcmp.lt.s32.totalorder %v1669, 16
        %vm1674 = vmand %vm1670, %vm1672
        %vm1675 = vmand %vm1671, %vm1673
        %v1676 = vsel %vm1674, %v1666, 0.0
        %v1677 = vsel %vm1675, %v1667, 0.0
        %v1678 = vadd.f32 %v1463, %v1676
        %v1679 = vadd.f32 %v1464, %v1677
        %1680 = vrot.lane.b32.xlu0 %v286, 125
        %v1681 = vpop.permute.xlu0 %1680
        %1682 = vrot.lane.b32.xlu0 %v287, 125
        %v1683 = vpop.permute.xlu0 %1682
        %1684 = vrot.lane.b32.xlu0 %v288, 125
        %v1685 = vpop.permute.xlu0 %1684
        %vm1686 = vcmp.lt.s32.totalorder %v259, 125
        %v1687 = vsel %vm1686, %v1683, %v1685
        %v1688 = vsel %vm1686, %v1681, %v1683
        %s1689 = sld [smem:[#allocation3 + $0x6]]
        %v1690 = vstv %s1689
        %v1691 = vmul.f32 %v1688, %v1690
        %v1692 = vmul.f32 %v1687, %v1690
        %v1693 = vadd.f32 %v1691, 0.0
        %v1694 = vadd.f32 %v1692, 0.0
        %1695 = vrot.lane.b32.xlu0 %v286, 109
        %v1696 = vpop.permute.xlu0 %1695
        %1697 = vrot.lane.b32.xlu0 %v287, 109
        %v1698 = vpop.permute.xlu0 %1697
        %1699 = vrot.lane.b32.xlu0 %v288, 109
        %v1700 = vpop.permute.xlu0 %1699
        %vm1701 = vcmp.lt.s32.totalorder %v259, 109
        %v1702 = vsel %vm1701, %v1698, %v1700
        %v1703 = vsel %vm1701, %v1696, %v1698
        %s1704 = sld [smem:[#allocation3 + $0xd]]
        %v1705 = vstv %s1704
        %v1706 = vmul.f32 %v1703, %v1705
        %v1707 = vmul.f32 %v1702, %v1705
        %v1708 = vadd.f32 %v1693, %v1706
        %v1709 = vadd.f32 %v1694, %v1707
        %1710 = vrot.lane.b32.xlu0 %v286, 93
        %v1711 = vpop.permute.xlu0 %1710
        %1712 = vrot.lane.b32.xlu0 %v287, 93
        %v1713 = vpop.permute.xlu0 %1712
        %1714 = vrot.lane.b32.xlu0 %v288, 93
        %v1715 = vpop.permute.xlu0 %1714
        %vm1716 = vcmp.lt.s32.totalorder %v259, 93
        %v1717 = vsel %vm1716, %v1713, %v1715
        %v1718 = vsel %vm1716, %v1711, %v1713
        %s1719 = sld [smem:[#allocation3 + $0x14]]
        %v1720 = vstv %s1719
        %v1721 = vmul.f32 %v1718, %v1720
        %v1722 = vmul.f32 %v1717, %v1720
        %v1723 = vadd.f32 %v1708, %v1721
        %v1724 = vadd.f32 %v1709, %v1722
        %1725 = vrot.lane.b32.xlu0 %v286, 77
        %v1726 = vpop.permute.xlu0 %1725
        %1727 = vrot.lane.b32.xlu0 %v287, 77
        %v1728 = vpop.permute.xlu0 %1727
        %1729 = vrot.lane.b32.xlu0 %v288, 77
        %v1730 = vpop.permute.xlu0 %1729
        %vm1731 = vcmp.lt.s32.totalorder %v259, 77
        %v1732 = vsel %vm1731, %v1728, %v1730
        %v1733 = vsel %vm1731, %v1726, %v1728
        %s1734 = sld [smem:[#allocation3 + $0x1b]]
        %v1735 = vstv %s1734
        %v1736 = vmul.f32 %v1733, %v1735
        %v1737 = vmul.f32 %v1732, %v1735
        %v1738 = vadd.f32 %v1723, %v1736
        %v1739 = vadd.f32 %v1724, %v1737
        %1740 = vrot.lane.b32.xlu0 %v286, 61
        %v1741 = vpop.permute.xlu0 %1740
        %1742 = vrot.lane.b32.xlu0 %v287, 61
        %v1743 = vpop.permute.xlu0 %1742
        %1744 = vrot.lane.b32.xlu0 %v288, 61
        %v1745 = vpop.permute.xlu0 %1744
        %vm1746 = vcmp.lt.s32.totalorder %v259, 61
        %v1747 = vsel %vm1746, %v1743, %v1745
        %v1748 = vsel %vm1746, %v1741, %v1743
        %s1749 = sld [smem:[#allocation3 + $0x22]]
        %v1750 = vstv %s1749
        %v1751 = vmul.f32 %v1748, %v1750
        %v1752 = vmul.f32 %v1747, %v1750
        %v1753 = vadd.f32 %v1738, %v1751
        %v1754 = vadd.f32 %v1739, %v1752
        %1755 = vrot.lane.b32.xlu0 %v286, 45
        %v1756 = vpop.permute.xlu0 %1755
        %1757 = vrot.lane.b32.xlu0 %v287, 45
        %v1758 = vpop.permute.xlu0 %1757
        %1759 = vrot.lane.b32.xlu0 %v288, 45
        %v1760 = vpop.permute.xlu0 %1759
        %vm1761 = vcmp.lt.s32.totalorder %v259, 45
        %v1762 = vsel %vm1761, %v1758, %v1760
        %v1763 = vsel %vm1761, %v1756, %v1758
        %s1764 = sld [smem:[#allocation3 + $0x29]]
        %v1765 = vstv %s1764
        %v1766 = vmul.f32 %v1763, %v1765
        %v1767 = vmul.f32 %v1762, %v1765
        %v1768 = vadd.f32 %v1753, %v1766
        %v1769 = vadd.f32 %v1754, %v1767
        %1770 = vrot.lane.b32.xlu0 %v286, 29
        %v1771 = vpop.permute.xlu0 %1770
        %1772 = vrot.lane.b32.xlu0 %v287, 29
        %v1773 = vpop.permute.xlu0 %1772
        %1774 = vrot.lane.b32.xlu0 %v288, 29
        %v1775 = vpop.permute.xlu0 %1774
        %vm1776 = vcmp.lt.s32.totalorder %v259, 29
        %v1777 = vsel %vm1776, %v1773, %v1775
        %v1778 = vsel %vm1776, %v1771, %v1773
        %s1779 = sld [smem:[#allocation3 + $0x30]]
        %v1780 = vstv %s1779
        %v1781 = vmul.f32 %v1778, %v1780
        %v1782 = vmul.f32 %v1777, %v1780
        %v1783 = vadd.f32 %v1768, %v1781
        %v1784 = vadd.f32 %v1769, %v1782
        %1785 = vrot.lane.b32.xlu0 %v398, 125
        %v1786 = vpop.permute.xlu0 %1785
        %1787 = vrot.lane.b32.xlu0 %v399, 125
        %v1788 = vpop.permute.xlu0 %1787
        %1789 = vrot.lane.b32.xlu0 %v400, 125
        %v1790 = vpop.permute.xlu0 %1789
        %v1791 = vsel %vm1686, %v1788, %v1790
        %v1792 = vsel %vm1686, %v1786, %v1788
        %s1793 = sld [smem:[#allocation3 + $0x37]]
        %v1794 = vstv %s1793
        %v1795 = vmul.f32 %v1792, %v1794
        %v1796 = vmul.f32 %v1791, %v1794
        %v1797 = vadd.f32 %v1783, %v1795
        %v1798 = vadd.f32 %v1784, %v1796
        %1799 = vrot.lane.b32.xlu0 %v398, 109
        %v1800 = vpop.permute.xlu0 %1799
        %1801 = vrot.lane.b32.xlu0 %v399, 109
        %v1802 = vpop.permute.xlu0 %1801
        %1803 = vrot.lane.b32.xlu0 %v400, 109
        %v1804 = vpop.permute.xlu0 %1803
        %v1805 = vsel %vm1701, %v1802, %v1804
        %v1806 = vsel %vm1701, %v1800, %v1802
        %s1807 = sld [smem:[#allocation3 + $0x3e]]
        %v1808 = vstv %s1807
        %v1809 = vmul.f32 %v1806, %v1808
        %v1810 = vmul.f32 %v1805, %v1808
        %v1811 = vadd.f32 %v1797, %v1809
        %v1812 = vadd.f32 %v1798, %v1810
        %1813 = vrot.lane.b32.xlu0 %v398, 93
        %v1814 = vpop.permute.xlu0 %1813
        %1815 = vrot.lane.b32.xlu0 %v399, 93
        %v1816 = vpop.permute.xlu0 %1815
        %1817 = vrot.lane.b32.xlu0 %v400, 93
        %v1818 = vpop.permute.xlu0 %1817
        %v1819 = vsel %vm1716, %v1816, %v1818
        %v1820 = vsel %vm1716, %v1814, %v1816
        %s1821 = sld [smem:[#allocation3 + $0x45]]
        %v1822 = vstv %s1821
        %v1823 = vmul.f32 %v1820, %v1822
        %v1824 = vmul.f32 %v1819, %v1822
        %v1825 = vadd.f32 %v1811, %v1823
        %v1826 = vadd.f32 %v1812, %v1824
        %1827 = vrot.lane.b32.xlu0 %v398, 77
        %v1828 = vpop.permute.xlu0 %1827
        %1829 = vrot.lane.b32.xlu0 %v399, 77
        %v1830 = vpop.permute.xlu0 %1829
        %1831 = vrot.lane.b32.xlu0 %v400, 77
        %v1832 = vpop.permute.xlu0 %1831
        %v1833 = vsel %vm1731, %v1830, %v1832
        %v1834 = vsel %vm1731, %v1828, %v1830
        %s1835 = sld [smem:[#allocation3 + $0x4c]]
        %v1836 = vstv %s1835
        %v1837 = vmul.f32 %v1834, %v1836
        %v1838 = vmul.f32 %v1833, %v1836
        %v1839 = vadd.f32 %v1825, %v1837
        %v1840 = vadd.f32 %v1826, %v1838
        %1841 = vrot.lane.b32.xlu0 %v398, 61
        %v1842 = vpop.permute.xlu0 %1841
        %1843 = vrot.lane.b32.xlu0 %v399, 61
        %v1844 = vpop.permute.xlu0 %1843
        %1845 = vrot.lane.b32.xlu0 %v400, 61
        %v1846 = vpop.permute.xlu0 %1845
        %v1847 = vsel %vm1746, %v1844, %v1846
        %v1848 = vsel %vm1746, %v1842, %v1844
        %s1849 = sld [smem:[#allocation3 + $0x53]]
        %v1850 = vstv %s1849
        %v1851 = vmul.f32 %v1848, %v1850
        %v1852 = vmul.f32 %v1847, %v1850
        %v1853 = vadd.f32 %v1839, %v1851
        %v1854 = vadd.f32 %v1840, %v1852
        %1855 = vrot.lane.b32.xlu0 %v398, 45
        %v1856 = vpop.permute.xlu0 %1855
        %1857 = vrot.lane.b32.xlu0 %v399, 45
        %v1858 = vpop.permute.xlu0 %1857
        %1859 = vrot.lane.b32.xlu0 %v400, 45
        %v1860 = vpop.permute.xlu0 %1859
        %v1861 = vsel %vm1761, %v1858, %v1860
        %v1862 = vsel %vm1761, %v1856, %v1858
        %s1863 = sld [smem:[#allocation3 + $0x5a]]
        %v1864 = vstv %s1863
        %v1865 = vmul.f32 %v1862, %v1864
        %v1866 = vmul.f32 %v1861, %v1864
        %v1867 = vadd.f32 %v1853, %v1865
        %v1868 = vadd.f32 %v1854, %v1866
        %1869 = vrot.lane.b32.xlu0 %v398, 29
        %v1870 = vpop.permute.xlu0 %1869
        %1871 = vrot.lane.b32.xlu0 %v399, 29
        %v1872 = vpop.permute.xlu0 %1871
        %1873 = vrot.lane.b32.xlu0 %v400, 29
        %v1874 = vpop.permute.xlu0 %1873
        %v1875 = vsel %vm1776, %v1872, %v1874
        %v1876 = vsel %vm1776, %v1870, %v1872
        %s1877 = sld [smem:[#allocation3 + $0x61]]
        %v1878 = vstv %s1877
        %v1879 = vmul.f32 %v1876, %v1878
        %v1880 = vmul.f32 %v1875, %v1878
        %v1881 = vadd.f32 %v1867, %v1879
        %v1882 = vadd.f32 %v1868, %v1880
        %v1883 = vadd.s32 %v283, 3
        %v1884 = vadd.s32 %v284, 3
        %vm1885 = vcmp.ge.s32.totalorder %v1883, 0
        %vm1886 = vcmp.ge.s32.totalorder %v1884, 0
        %vm1887 = vcmp.lt.s32.totalorder %v1883, 16
        %vm1888 = vcmp.lt.s32.totalorder %v1884, 16
        %vm1889 = vmand %vm1885, %vm1887
        %vm1890 = vmand %vm1886, %vm1888
        %v1891 = vsel %vm1889, %v1881, 0.0
        %v1892 = vsel %vm1890, %v1882, 0.0
        %v1893 = vadd.f32 %v1678, %v1891
        %v1894 = vadd.f32 %v1679, %v1892
        %v1895 = vxor.u32 %v1893, 2147483648
        %v1896 = vxor.u32 %v1894, 2147483648
        %v1897 = vmul.f32 %v1895, 1.442695
        %v1898 = vpow.pop %v1897
        %v1899 = vmul.f32 %v1896, 1.442695
        %v1900 = vpow.pop %v1899
        %v1901 = vadd.f32 %v1898, 1.0
        %v1902 = vadd.f32 %v1900, 1.0
        %v1903 = vrcp.pop %v1901
        %v1904 = vmul.f32 %v1901, %v1903
        %v1905 = vsub.f32 1.0, %v1904
        %v1906 = vmul.f32 %v1903, %v1905
        %v1907 = vadd.f32 %v1903, %v1906
        %vm1908 = vweird.f32 %v1901
        %vm1909 = vweird.f32 %v1903
        %vm1910 = vmor %vm1908, %vm1909
        %v1911 = vsel %vm1910, %v1903, %v1907
        %v1912 = vand.u32 2147483647, %v1901
        %vm1913 = vcmp.eq.f32.partialorder %v1912, 8.507059e+37
        %v1914 = vand.u32 %v1901, 2147483648
        %v1915 = vor.u32 1.1754944e-38, %v1914
        %v1916 = vsel %vm1913, %v1915, %v1911
        %v1917 = vmul.f32 1.0, %v1916
        %v1918 = vrcp.pop %v1902
        %v1919 = vmul.f32 %v1902, %v1918
        %v1920 = vsub.f32 1.0, %v1919
        %v1921 = vmul.f32 %v1918, %v1920
        %v1922 = vadd.f32 %v1918, %v1921
        %vm1923 = vweird.f32 %v1902
        %vm1924 = vweird.f32 %v1918
        %vm1925 = vmor %vm1923, %vm1924
        %v1926 = vsel %vm1925, %v1918, %v1922
        %v1927 = vand.u32 2147483647, %v1902
        %vm1928 = vcmp.eq.f32.partialorder %v1927, 8.507059e+37
        %v1929 = vand.u32 %v1902, 2147483648
        %v1930 = vor.u32 1.1754944e-38, %v1929
        %v1931 = vsel %vm1928, %v1930, %v1926
        %v1932 = vmul.f32 1.0, %v1931
        %v1933 = vperm.slane %v1917, 0
        %v1934 = vperm.slane %v1932, 0
        %v1935 = vld [vmem:[%s178] sm:$0xff]
        %v1938 = vrot.slane %v1934, 4
        %v1939 = vsel %vm186, %v1933, %v1938
        %v1941 = vmul.f32 %v1935, %v1939
        %s1942 = smul.addr %s176, 4
        %s1943 = scalar_lea.vmem %s175, %s1942 [#allocation8]
        %1944 = vst [vmem:[%s1943] sm:$0xff] %v1941
        %s1945 = sand.u32 %s75, 1
        %s1946 = scalar_lea.sflag [#allocation5], %s1945
        %s1947 = sand.u32 %s75, 1
        %s1948 = smul.addr %s1947, 8
        %s1949 = scalar_lea.vmem [#allocation8], %s1948
        // Predicated region
        $region37: #{tpu_custom_call.1} parent=27 // pred_check
          %p1950 = pneg %p85
        $region38: #{tpu_custom_call.1} parent=27 // pred_check_branch
          %1952 = sbr.rel (%p1950) target = $region40
        $region39: #{tpu_custom_call.1} parent=27 // pred_region
          %1954 = vsyncadd %s1946, 0
          %s1955 = smul.addr %s20, 2
          %s1956 = smul.addr %s1955, 4
          %s1957 = scalar_lea.hbm %s2, %s1956
          %s1959 = sshll.u32 %s1949, 4
          %s1960 = int_to_ptr.vmem [resolvable:$true] %s1959
          %s1961 = sshll.u32 %s1957, 4
          %s1962 = int_to_ptr.hbm [resolvable:$true] %s1961
          %1964 = dma.vmem_to_hbm [thread:$0]  %s1960, 128, %s1962, %s1946
        $region40: #{tpu_custom_call.1} parent=27 // pred_fallthru
          _
      $region28: #{tpu_custom_call.1} parent=5 // pred_fallthru
        _
      %p1965 = scmp.le.s32.totalorder 2, %s15
      // Predicated region
      $region41: #{tpu_custom_call.1} parent=5 // pred_check
        %p1966 = pneg %p1965
      $region42: #{tpu_custom_call.1} parent=5 // pred_check_branch
        %1968 = sbr.rel (%p1966) target = $region44
      $region43: #{tpu_custom_call.1} parent=5 // pred_region
        %s1969 = ssub.s32 %s15, 2
        // Predicated region
        $region45: #{tpu_custom_call.1} parent=43 // pred_check
          %p1970 = pneg %p91
        $region46: #{tpu_custom_call.1} parent=43 // pred_check_branch
          %1972 = sbr.rel (%p1970) target = $region48
        $region47: #{tpu_custom_call.1} parent=43 // pred_region
          %s1973 = sand.u32 %s76, 1
          %s1974 = scalar_lea.sflag [#allocation5], %s1973
          %s1975 = sand.u32 %s76, 1
          %s1976 = smul.addr %s1975, 8
          %s1977 = scalar_lea.vmem [#allocation8], %s1976
          %1979 = dma.done %s1974, 128
        $region48: #{tpu_custom_call.1} parent=43 // pred_fallthru
          _
      $region44: #{tpu_custom_call.1} parent=5 // pred_fallthru
        _
    $region6: #{tpu_custom_call.1} parent=1 // loop_footer
      %s19 = sadd.s32 1, %s15
    $region7: #{tpu_custom_call.1} parent=1 // loop_footer_branch
      %14 = sbr.rel target = $region3
    $region8: #{tpu_custom_call.1} parent=1 // loop_exit
      _
    %1980 = vsyncpa [#allocation4], 1
    %s1981 = scalar_lea.sflag [#allocation4], 1
    %1982 = vsyncpa %s1981, 1
    %1983 = vsyncpa [#allocation5], 1
    %s1984 = scalar_lea.sflag [#allocation5], 1
    %1985 = vsyncpa %s1984, 1
    %1986 = vsyncpa [#allocation6], 1
    %s1987 = scalar_lea.sflag [#allocation6], 1
    %1988 = vsyncpa %s1987, 1

</llo_original>
